<compile_context>
chip_gen: v6e
topology: v6e:2x2x1
jax: 0.10.0
libtpu: 0.0.40
codegen_flags: <defaults>
</compile_context>

<pallas_src>
import functools

import numpy as np
import jax
import jax.numpy as jnp
from jax import lax
from jax.experimental import pallas as pl
from jax.experimental.pallas import tpu as pltpu


def _spatial_attn_kernel(x_ref, m_ref,
                         wq_ref, wk_ref, wj_ref, wv_ref,
                         bq_ref, bk_ref, bj_ref, bv_ref,
                         gamma_ref, o_ref,
                         *, shift_w, shift_h, shift_d):
    """Per-batch block.

    x_ref        : (C, N)      flattened input x (N = H*W*D, D fastest)
    m_ref        : (6, N)      boundary masks (W-,W+,H-,H+,D-,D+), 1.0 = in-bounds
    wq/wk/wj_ref : (3, Ck, C)  per-tap weight matrices of the 3-tap convs
    wv_ref       : (C, C)      1x1x1 value-conv weights
    bq/bk/bj_ref : (Ck, 1), bv_ref: (C, 1)
    gamma_ref    : (1,) in SMEM
    o_ref        : (C, N)
    """
    f32 = jnp.float32
    bf16 = jnp.bfloat16

    x = x_ref[...]                      # (C, N) f32
    N = x.shape[-1]

    def proj3(w_ref, b_ref, shift, m_lo, m_hi):
        # 3-tap Conv3d along one spatial axis as 3 shifted matmuls.  The
        # shifted slabs are built in-kernel with XLU rolls; the wrapped columns
        # of the off-center taps are zeroed AFTER the matmul (the mask zeroes
        # whole lanes, so it commutes with the channel contraction and only
        # touches (Ck, N) instead of (C, N)).
        x_m = pltpu.roll(x, shift=shift, axis=1)        # holds x[:, n - shift]
        x_p = pltpu.roll(x, shift=N - shift, axis=1)    # holds x[:, n + shift]
        y = jnp.dot(w_ref[1], x, preferred_element_type=f32)
        y = y + m_lo * jnp.dot(w_ref[0], x_m, preferred_element_type=f32)
        y = y + m_hi * jnp.dot(w_ref[2], x_p, preferred_element_type=f32)
        return y + b_ref[...]                           # (Ck, N)

    q = proj3(wq_ref, bq_ref, shift_w, m_ref[0:1, :], m_ref[1:2, :])  # W axis
    k = proj3(wk_ref, bk_ref, shift_h, m_ref[2:3, :], m_ref[3:4, :])  # H axis
    j = proj3(wj_ref, bj_ref, shift_d, m_ref[4:5, :], m_ref[5:6, :])  # D axis
    v = jnp.dot(wv_ref[...], x, preferred_element_type=f32) + bv_ref[...]  # (C, N)

    # Reassociated affinity chain: (q^T k)(j^T k) == q^T ((k j^T) k).
    # Removes the N*N*N matmul and two live (N,N) buffers; numerically exact
    # up to FP summation order.
    s_kj = lax.dot_general(k, j, (((1,), (1,)), ((), ())),
                           preferred_element_type=f32)          # (Ck, Ck)
    k2 = jnp.dot(s_kj, k, preferred_element_type=f32)           # (Ck, N)
    aff = lax.dot_general(q, k2, (((0,), (0,)), ((), ())),
                          preferred_element_type=f32)           # (N, N)

    # Softmax over the last dim; denominator via EUP approx reciprocal so the
    # normalization is N^2 multiplies instead of N^2 divides.
    aff = aff - jnp.max(aff, axis=-1, keepdims=True)
    e = jnp.exp(aff)
    inv = pl.reciprocal(jnp.sum(e, axis=-1, keepdims=True), approx=True)  # (N, 1)
    sm = (e * inv).astype(bf16)                                  # (N, N) bf16

    # Dominant matmul on the native bf16 MXU path, f32 accumulation.
    w = jnp.dot(v.astype(bf16), sm, preferred_element_type=f32)  # (C, N)

    gamma = gamma_ref[0]
    o_ref[...] = (gamma * w + x).astype(o_ref.dtype)


def spatial_attention_block_3d(x, params):
    """x: (B, C, H, W, D) float32; returns same shape."""
    B, C, H, W, D = x.shape
    N = H * W * D
    Ck = params["wq"].shape[1]

    x_flat = x.reshape(B, C, N)

    # Tiny (6, N) boundary-validity masks (1.0 inside, 0.0 where the conv tap
    # falls into the zero padding).  This replaces the 9x pre-shifted input
    # slabs of the previous version — all shifting now happens in-kernel.
    n = jnp.arange(N, dtype=jnp.int32)
    h_idx = n // (W * D)
    w_idx = (n // D) % W
    d_idx = n % D
    edge_masks = jnp.stack([
        w_idx > 0, w_idx < W - 1,     # query conv taps (-1, +1) along W
        h_idx > 0, h_idx < H - 1,     # key   conv taps (-1, +1) along H
        d_idx > 0, d_idx < D - 1,     # judge conv taps (-1, +1) along D
    ], axis=0).astype(x.dtype)        # (6, N)

    batch_spec = pl.BlockSpec((None, C, N), lambda b: (b, 0, 0))

    def const_spec(shape):
        nd = len(shape)
        return pl.BlockSpec(shape, lambda b, _nd=nd: (0,) * _nd)

    grid_spec = pltpu.PrefetchScalarGridSpec(
        num_scalar_prefetch=0,
        grid=(B,),
        in_specs=[
            batch_spec,                     # x_flat         (B, C, N)
            const_spec((6, N)),             # edge_masks
            const_spec((3, Ck, C)),         # wq
            const_spec((3, Ck, C)),         # wk
            const_spec((3, Ck, C)),         # wj
            const_spec((C, C)),             # wv
            const_spec((Ck, 1)),            # bq
            const_spec((Ck, 1)),            # bk
            const_spec((Ck, 1)),            # bj
            const_spec((C, 1)),             # bv
            pl.BlockSpec(memory_space=pltpu.MemorySpace.SMEM),   # gamma (1,)
        ],
        out_specs=batch_spec,
    )

    kernel = functools.partial(_spatial_attn_kernel,
                               shift_w=D, shift_h=W * D, shift_d=1)

    out_flat = pl.pallas_call(
        kernel,
        out_shape=jax.ShapeDtypeStruct((B, C, N), x.dtype),
        grid_spec=grid_spec,
        compiler_params=pltpu.CompilerParams(
            dimension_semantics=("parallel",)),
    )(x_flat, edge_masks,
      params["wq"], params["wk"], params["wj"], params["wv"],
      params["bq"], params["bk"], params["bj"], params["bv"],
      params["gamma"])

    return out_flat.reshape(B, C, H, W, D)


def init_params(key, C, dtype=jnp.float32):
    """Deterministic synthetic init.  Shapes follow the module __init__:
       query/key/judge: Conv3d(C, C//8, 3-tap), value: Conv3d(C, C, 1), gamma scalar."""
    Ck = C // 8
    ks = jax.random.split(key, 8)
    s = 0.05
    params = dict(
        wq=s * jax.random.normal(ks[0], (3, Ck, C), dtype),   # taps of (Ck,C,1,3,1)
        wk=s * jax.random.normal(ks[1], (3, Ck, C), dtype),   # taps of (Ck,C,3,1,1)
        wj=s * jax.random.normal(ks[2], (3, Ck, C), dtype),   # taps of (Ck,C,1,1,3)
        wv=s * jax.random.normal(ks[3], (C, C), dtype),       # (C,C,1,1,1) squeezed
        bq=s * jax.random.normal(ks[4], (Ck, 1), dtype),
        bk=s * jax.random.normal(ks[5], (Ck, 1), dtype),
        bj=s * jax.random.normal(ks[6], (Ck, 1), dtype),
        bv=s * jax.random.normal(ks[7], (C, 1), dtype),
        # Module init is torch.zeros(1); a nonzero value is used here so the
        # attention path is actually exercised numerically (value only, same math).
        gamma=jnp.full((1,), 0.5, dtype),
    )
    return params


# ---------------- pure-JAX reference (true Conv3d, HIGHEST precision) ----------------
def _conv3d_ref(x, w, b, padding):
    dn = lax.conv_dimension_numbers(x.shape, w.shape, ("NCDHW", "OIDHW", "NCDHW"))
    y = lax.conv_general_dilated(x, w, window_strides=(1, 1, 1),
                                 padding=[(p, p) for p in padding],
                                 dimension_numbers=dn,
                                 precision=lax.Precision.HIGHEST)
    return y + b.reshape(1, -1, 1, 1, 1)


def reference_forward(x, p):
    B, C, H, W, D = x.shape
    N = H * W * D
    Ck = p["wq"].shape[1]
    wq_full = jnp.transpose(p["wq"], (1, 2, 0))[:, :, None, :, None]   # (Ck,C,1,3,1)
    wk_full = jnp.transpose(p["wk"], (1, 2, 0))[:, :, :, None, None]   # (Ck,C,3,1,1)
    wj_full = jnp.transpose(p["wj"], (1, 2, 0))[:, :, None, None, :]   # (Ck,C,1,1,3)
    wv_full = p["wv"][:, :, None, None, None]                          # (C,C,1,1,1)
    q = _conv3d_ref(x, wq_full, p["bq"].reshape(-1), (0, 1, 0)).reshape(B, Ck, N)
    k = _conv3d_ref(x, wk_full, p["bk"].reshape(-1), (1, 0, 0)).reshape(B, Ck, N)
    j = _conv3d_ref(x, wj_full, p["bj"].reshape(-1), (0, 0, 1)).reshape(B, Ck, N)
    v = _conv3d_ref(x, wv_full, p["bv"].reshape(-1), (0, 0, 0)).reshape(B, C, N)
    hp = lax.Precision.HIGHEST
    aff1 = jnp.matmul(jnp.swapaxes(q, 1, 2), k, precision=hp)          # (B,N,N)
    aff2 = jnp.matmul(jnp.swapaxes(j, 1, 2), k, precision=hp)
    aff = jnp.matmul(aff1, aff2, precision=hp)
    aff = jax.nn.softmax(aff, axis=-1)
    w = jnp.matmul(v, aff, precision=hp)                               # (B,C,N)
    out = p["gamma"].reshape(()) * w + x.reshape(B, C, N)
    return out.reshape(B, C, H, W, D)


if __name__ == "__main__":
    key = jax.random.PRNGKey(0)
    B, C, H, W, D = 2, 32, 8, 8, 4          # small shapes; C divisible by 8
    kx, kp = jax.random.split(key)
    x = jax.random.normal(kx, (B, C, H, W, D), jnp.float32)
    params = init_params(kp, C)

    out = spatial_attention_block_3d(x, params)
    out = jax.block_until_ready(out)

    ref = reference_forward(x, params)
    assert out.shape == (B, C, H, W, D)
    np.testing.assert_allclose(np.asarray(out), np.asarray(ref), rtol=2e-2, atol=2e-2)
    print("KERNEL_OK")
</pallas_src>

<mosaic_0001>
module attributes {stable_mosaic.version = 11 : i64} {
  func.func @_spatial_attn_kernel(%arg0: i32, %arg1: memref<1x32x256xf32, #tpu.memory_space<vmem>>, %arg2: memref<6x256xf32, #tpu.memory_space<vmem>>, %arg3: memref<3x4x32xf32, #tpu.memory_space<vmem>>, %arg4: memref<3x4x32xf32, #tpu.memory_space<vmem>>, %arg5: memref<3x4x32xf32, #tpu.memory_space<vmem>>, %arg6: memref<32x32xf32, #tpu.memory_space<vmem>>, %arg7: memref<4x1xf32, #tpu.memory_space<vmem>>, %arg8: memref<4x1xf32, #tpu.memory_space<vmem>>, %arg9: memref<4x1xf32, #tpu.memory_space<vmem>>, %arg10: memref<32x1xf32, #tpu.memory_space<vmem>>, %arg11: memref<1xf32, #tpu.memory_space<smem>>, %arg12: memref<1x32x256xf32, #tpu.memory_space<vmem>>) attributes {dimension_semantics = [#tpu.dimension_semantics<parallel>], iteration_bounds = array<i64: 2>, scalar_prefetch = 0 : i64, scratch_operands = 0 : i64, tpu.core_type = #tpu.core_type<tc>, window_params = [{transform_indices = @transform_0, window_bounds = array<i64: 1, 32, 256>}, {pipeline_mode = #tpu.pipeline_mode<synchronous>, transform_indices = @transform_1, window_bounds = array<i64: 6, 256>}, {pipeline_mode = #tpu.pipeline_mode<synchronous>, transform_indices = @transform_2, window_bounds = array<i64: 3, 4, 32>}, {pipeline_mode = #tpu.pipeline_mode<synchronous>, transform_indices = @transform_3, window_bounds = array<i64: 3, 4, 32>}, {pipeline_mode = #tpu.pipeline_mode<synchronous>, transform_indices = @transform_4, window_bounds = array<i64: 3, 4, 32>}, {pipeline_mode = #tpu.pipeline_mode<synchronous>, transform_indices = @transform_5, window_bounds = array<i64: 32, 32>}, {pipeline_mode = #tpu.pipeline_mode<synchronous>, transform_indices = @transform_6, window_bounds = array<i64: 4, 1>}, {pipeline_mode = #tpu.pipeline_mode<synchronous>, transform_indices = @transform_7, window_bounds = array<i64: 4, 1>}, {pipeline_mode = #tpu.pipeline_mode<synchronous>, transform_indices = @transform_8, window_bounds = array<i64: 4, 1>}, {pipeline_mode = #tpu.pipeline_mode<synchronous>, transform_indices = @transform_9, window_bounds = array<i64: 32, 1>}, {transform_indices = @transform_10, window_bounds = array<i64: 1>}, {transform_indices = @transform_11, window_bounds = array<i64: 1, 32, 256>}]} {
    %c0 = arith.constant 0 : index
    %c0_0 = arith.constant 0 : index
    %c0_1 = arith.constant 0 : index
    %0 = vector.load %arg1[%c0, %c0_0, %c0_1] : memref<1x32x256xf32, #tpu.memory_space<vmem>>, vector<1x32x256xf32>
    %1 = vector.shape_cast %0 : vector<1x32x256xf32> to vector<32x256xf32>
    %c0_2 = arith.constant 0 : index
    %c0_3 = arith.constant 0 : index
    %2 = vector.load %arg2[%c0_2, %c0_3] : memref<6x256xf32, #tpu.memory_space<vmem>>, vector<1x256xf32>
    %c1 = arith.constant 1 : index
    %c0_4 = arith.constant 0 : index
    %3 = vector.load %arg2[%c1, %c0_4] : memref<6x256xf32, #tpu.memory_space<vmem>>, vector<1x256xf32>
    %c4_i32 = arith.constant 4 : i32
    %4 = tpu.dynamic_rotate %1 by %c4_i32 dim 1 : vector<32x256xf32>, i32 -> vector<32x256xf32>
    %c252_i32 = arith.constant 252 : i32
    %5 = tpu.dynamic_rotate %1 by %c252_i32 dim 1 : vector<32x256xf32>, i32 -> vector<32x256xf32>
    %c1_5 = arith.constant 1 : index
    %c0_6 = arith.constant 0 : index
    %c0_7 = arith.constant 0 : index
    %6 = vector.load %arg3[%c1_5, %c0_6, %c0_7] : memref<3x4x32xf32, #tpu.memory_space<vmem>>, vector<1x4x32xf32>
    %7 = vector.shape_cast %6 : vector<1x4x32xf32> to vector<4x32xf32>
    %cst = arith.constant dense<0.000000e+00> : vector<4x256xf32>
    %8 = tpu.matmul %7, %1, %cst {dimension_numbers = #tpu.dot_dimension_numbers<[1], [0], [0], [1], [0, 0, 1, 1], [], []>} : vector<4x32xf32>, vector<32x256xf32>, vector<4x256xf32> -> vector<4x256xf32>
    %c0_8 = arith.constant 0 : index
    %c0_9 = arith.constant 0 : index
    %c0_10 = arith.constant 0 : index
    %9 = vector.load %arg3[%c0_8, %c0_9, %c0_10] : memref<3x4x32xf32, #tpu.memory_space<vmem>>, vector<1x4x32xf32>
    %10 = vector.shape_cast %9 : vector<1x4x32xf32> to vector<4x32xf32>
    %cst_11 = arith.constant dense<0.000000e+00> : vector<4x256xf32>
    %11 = tpu.matmul %10, %4, %cst_11 {dimension_numbers = #tpu.dot_dimension_numbers<[1], [0], [0], [1], [0, 0, 1, 1], [], []>} : vector<4x32xf32>, vector<32x256xf32>, vector<4x256xf32> -> vector<4x256xf32>
    %12 = vector.broadcast %2 : vector<1x256xf32> to vector<4x256xf32>
    %13 = arith.mulf %12, %11 : vector<4x256xf32>
    %14 = arith.addf %8, %13 : vector<4x256xf32>
    %c2 = arith.constant 2 : index
    %c0_12 = arith.constant 0 : index
    %c0_13 = arith.constant 0 : index
    %15 = vector.load %arg3[%c2, %c0_12, %c0_13] : memref<3x4x32xf32, #tpu.memory_space<vmem>>, vector<1x4x32xf32>
    %16 = vector.shape_cast %15 : vector<1x4x32xf32> to vector<4x32xf32>
    %cst_14 = arith.constant dense<0.000000e+00> : vector<4x256xf32>
    %17 = tpu.matmul %16, %5, %cst_14 {dimension_numbers = #tpu.dot_dimension_numbers<[1], [0], [0], [1], [0, 0, 1, 1], [], []>} : vector<4x32xf32>, vector<32x256xf32>, vector<4x256xf32> -> vector<4x256xf32>
    %18 = vector.broadcast %3 : vector<1x256xf32> to vector<4x256xf32>
    %19 = arith.mulf %18, %17 : vector<4x256xf32>
    %20 = arith.addf %14, %19 : vector<4x256xf32>
    %c0_15 = arith.constant 0 : index
    %c0_16 = arith.constant 0 : index
    %21 = vector.load %arg7[%c0_15, %c0_16] : memref<4x1xf32, #tpu.memory_space<vmem>>, vector<4x1xf32>
    %22 = vector.broadcast %21 : vector<4x1xf32> to vector<4x256xf32>
    %23 = arith.addf %20, %22 : vector<4x256xf32>
    %c2_17 = arith.constant 2 : index
    %c0_18 = arith.constant 0 : index
    %24 = vector.load %arg2[%c2_17, %c0_18] : memref<6x256xf32, #tpu.memory_space<vmem>>, vector<1x256xf32>
    %c3 = arith.constant 3 : index
    %c0_19 = arith.constant 0 : index
    %25 = vector.load %arg2[%c3, %c0_19] : memref<6x256xf32, #tpu.memory_space<vmem>>, vector<1x256xf32>
    %c32_i32 = arith.constant 32 : i32
    %26 = tpu.dynamic_rotate %1 by %c32_i32 dim 1 : vector<32x256xf32>, i32 -> vector<32x256xf32>
    %c224_i32 = arith.constant 224 : i32
    %27 = tpu.dynamic_rotate %1 by %c224_i32 dim 1 : vector<32x256xf32>, i32 -> vector<32x256xf32>
    %c1_20 = arith.constant 1 : index
    %c0_21 = arith.constant 0 : index
    %c0_22 = arith.constant 0 : index
    %28 = vector.load %arg4[%c1_20, %c0_21, %c0_22] : memref<3x4x32xf32, #tpu.memory_space<vmem>>, vector<1x4x32xf32>
    %29 = vector.shape_cast %28 : vector<1x4x32xf32> to vector<4x32xf32>
    %cst_23 = arith.constant dense<0.000000e+00> : vector<4x256xf32>
    %30 = tpu.matmul %29, %1, %cst_23 {dimension_numbers = #tpu.dot_dimension_numbers<[1], [0], [0], [1], [0, 0, 1, 1], [], []>} : vector<4x32xf32>, vector<32x256xf32>, vector<4x256xf32> -> vector<4x256xf32>
    %c0_24 = arith.constant 0 : index
    %c0_25 = arith.constant 0 : index
    %c0_26 = arith.constant 0 : index
    %31 = vector.load %arg4[%c0_24, %c0_25, %c0_26] : memref<3x4x32xf32, #tpu.memory_space<vmem>>, vector<1x4x32xf32>
    %32 = vector.shape_cast %31 : vector<1x4x32xf32> to vector<4x32xf32>
    %cst_27 = arith.constant dense<0.000000e+00> : vector<4x256xf32>
    %33 = tpu.matmul %32, %26, %cst_27 {dimension_numbers = #tpu.dot_dimension_numbers<[1], [0], [0], [1], [0, 0, 1, 1], [], []>} : vector<4x32xf32>, vector<32x256xf32>, vector<4x256xf32> -> vector<4x256xf32>
    %34 = vector.broadcast %24 : vector<1x256xf32> to vector<4x256xf32>
    %35 = arith.mulf %34, %33 : vector<4x256xf32>
    %36 = arith.addf %30, %35 : vector<4x256xf32>
    %c2_28 = arith.constant 2 : index
    %c0_29 = arith.constant 0 : index
    %c0_30 = arith.constant 0 : index
    %37 = vector.load %arg4[%c2_28, %c0_29, %c0_30] : memref<3x4x32xf32, #tpu.memory_space<vmem>>, vector<1x4x32xf32>
    %38 = vector.shape_cast %37 : vector<1x4x32xf32> to vector<4x32xf32>
    %cst_31 = arith.constant dense<0.000000e+00> : vector<4x256xf32>
    %39 = tpu.matmul %38, %27, %cst_31 {dimension_numbers = #tpu.dot_dimension_numbers<[1], [0], [0], [1], [0, 0, 1, 1], [], []>} : vector<4x32xf32>, vector<32x256xf32>, vector<4x256xf32> -> vector<4x256xf32>
    %40 = vector.broadcast %25 : vector<1x256xf32> to vector<4x256xf32>
    %41 = arith.mulf %40, %39 : vector<4x256xf32>
    %42 = arith.addf %36, %41 : vector<4x256xf32>
    %c0_32 = arith.constant 0 : index
    %c0_33 = arith.constant 0 : index
    %43 = vector.load %arg8[%c0_32, %c0_33] : memref<4x1xf32, #tpu.memory_space<vmem>>, vector<4x1xf32>
    %44 = vector.broadcast %43 : vector<4x1xf32> to vector<4x256xf32>
    %45 = arith.addf %42, %44 : vector<4x256xf32>
    %c4 = arith.constant 4 : index
    %c0_34 = arith.constant 0 : index
    %46 = vector.load %arg2[%c4, %c0_34] : memref<6x256xf32, #tpu.memory_space<vmem>>, vector<1x256xf32>
    %c5 = arith.constant 5 : index
    %c0_35 = arith.constant 0 : index
    %47 = vector.load %arg2[%c5, %c0_35] : memref<6x256xf32, #tpu.memory_space<vmem>>, vector<1x256xf32>
    %c1_i32 = arith.constant 1 : i32
    %48 = tpu.dynamic_rotate %1 by %c1_i32 dim 1 : vector<32x256xf32>, i32 -> vector<32x256xf32>
    %c255_i32 = arith.constant 255 : i32
    %49 = tpu.dynamic_rotate %1 by %c255_i32 dim 1 : vector<32x256xf32>, i32 -> vector<32x256xf32>
    %c1_36 = arith.constant 1 : index
    %c0_37 = arith.constant 0 : index
    %c0_38 = arith.constant 0 : index
    %50 = vector.load %arg5[%c1_36, %c0_37, %c0_38] : memref<3x4x32xf32, #tpu.memory_space<vmem>>, vector<1x4x32xf32>
    %51 = vector.shape_cast %50 : vector<1x4x32xf32> to vector<4x32xf32>
    %cst_39 = arith.constant dense<0.000000e+00> : vector<4x256xf32>
    %52 = tpu.matmul %51, %1, %cst_39 {dimension_numbers = #tpu.dot_dimension_numbers<[1], [0], [0], [1], [0, 0, 1, 1], [], []>} : vector<4x32xf32>, vector<32x256xf32>, vector<4x256xf32> -> vector<4x256xf32>
    %c0_40 = arith.constant 0 : index
    %c0_41 = arith.constant 0 : index
    %c0_42 = arith.constant 0 : index
    %53 = vector.load %arg5[%c0_40, %c0_41, %c0_42] : memref<3x4x32xf32, #tpu.memory_space<vmem>>, vector<1x4x32xf32>
    %54 = vector.shape_cast %53 : vector<1x4x32xf32> to vector<4x32xf32>
    %cst_43 = arith.constant dense<0.000000e+00> : vector<4x256xf32>
    %55 = tpu.matmul %54, %48, %cst_43 {dimension_numbers = #tpu.dot_dimension_numbers<[1], [0], [0], [1], [0, 0, 1, 1], [], []>} : vector<4x32xf32>, vector<32x256xf32>, vector<4x256xf32> -> vector<4x256xf32>
    %56 = vector.broadcast %46 : vector<1x256xf32> to vector<4x256xf32>
    %57 = arith.mulf %56, %55 : vector<4x256xf32>
    %58 = arith.addf %52, %57 : vector<4x256xf32>
    %c2_44 = arith.constant 2 : index
    %c0_45 = arith.constant 0 : index
    %c0_46 = arith.constant 0 : index
    %59 = vector.load %arg5[%c2_44, %c0_45, %c0_46] : memref<3x4x32xf32, #tpu.memory_space<vmem>>, vector<1x4x32xf32>
    %60 = vector.shape_cast %59 : vector<1x4x32xf32> to vector<4x32xf32>
    %cst_47 = arith.constant dense<0.000000e+00> : vector<4x256xf32>
    %61 = tpu.matmul %60, %49, %cst_47 {dimension_numbers = #tpu.dot_dimension_numbers<[1], [0], [0], [1], [0, 0, 1, 1], [], []>} : vector<4x32xf32>, vector<32x256xf32>, vector<4x256xf32> -> vector<4x256xf32>
    %62 = vector.broadcast %47 : vector<1x256xf32> to vector<4x256xf32>
    %63 = arith.mulf %62, %61 : vector<4x256xf32>
    %64 = arith.addf %58, %63 : vector<4x256xf32>
    %c0_48 = arith.constant 0 : index
    %c0_49 = arith.constant 0 : index
    %65 = vector.load %arg9[%c0_48, %c0_49] : memref<4x1xf32, #tpu.memory_space<vmem>>, vector<4x1xf32>
    %66 = vector.broadcast %65 : vector<4x1xf32> to vector<4x256xf32>
    %67 = arith.addf %64, %66 : vector<4x256xf32>
    %c0_50 = arith.constant 0 : index
    %c0_51 = arith.constant 0 : index
    %68 = vector.load %arg6[%c0_50, %c0_51] : memref<32x32xf32, #tpu.memory_space<vmem>>, vector<32x32xf32>
    %cst_52 = arith.constant dense<0.000000e+00> : vector<32x256xf32>
    %69 = tpu.matmul %68, %1, %cst_52 {dimension_numbers = #tpu.dot_dimension_numbers<[1], [0], [0], [1], [0, 0, 1, 1], [], []>} : vector<32x32xf32>, vector<32x256xf32>, vector<32x256xf32> -> vector<32x256xf32>
    %c0_53 = arith.constant 0 : index
    %c0_54 = arith.constant 0 : index
    %70 = vector.load %arg10[%c0_53, %c0_54] : memref<32x1xf32, #tpu.memory_space<vmem>>, vector<32x1xf32>
    %71 = vector.broadcast %70 : vector<32x1xf32> to vector<32x256xf32>
    %72 = arith.addf %69, %71 : vector<32x256xf32>
    %cst_55 = arith.constant dense<0.000000e+00> : vector<4x4xf32>
    %73 = tpu.matmul %45, %67, %cst_55 {dimension_numbers = #tpu.dot_dimension_numbers<[1], [1], [0], [0], [0, 0, 1, 0], [], []>} : vector<4x256xf32>, vector<4x256xf32>, vector<4x4xf32> -> vector<4x4xf32>
    %cst_56 = arith.constant dense<0.000000e+00> : vector<4x256xf32>
    %74 = tpu.matmul %73, %45, %cst_56 {dimension_numbers = #tpu.dot_dimension_numbers<[1], [0], [0], [1], [0, 0, 1, 1], [], []>} : vector<4x4xf32>, vector<4x256xf32>, vector<4x256xf32> -> vector<4x256xf32>
    %cst_57 = arith.constant dense<0.000000e+00> : vector<256x256xf32>
    %75 = tpu.matmul %23, %74, %cst_57 {dimension_numbers = #tpu.dot_dimension_numbers<[0], [0], [1], [1], [0, 1, 1, 1], [], []>} : vector<4x256xf32>, vector<4x256xf32>, vector<256x256xf32> -> vector<256x256xf32>
    %cst_58 = arith.constant dense<0xFF800000> : vector<256xf32>
    %76 = vector.multi_reduction <maximumf>, %75, %cst_58 [1] : vector<256x256xf32> to vector<256xf32>
    %77 = vector.shape_cast %76 : vector<256xf32> to vector<256x1xf32>
    %78 = vector.broadcast %77 : vector<256x1xf32> to vector<256x256xf32>
    %79 = arith.subf %75, %78 : vector<256x256xf32>
    %80 = math.exp %79 : vector<256x256xf32>
    %cst_59 = arith.constant dense<0.000000e+00> : vector<256xf32>
    %81 = vector.multi_reduction <add>, %80, %cst_59 [1] : vector<256x256xf32> to vector<256xf32>
    %82 = vector.shape_cast %81 : vector<256xf32> to vector<256x1xf32>
    %83 = tpu.reciprocal %82 {approx = true} : vector<256x1xf32> -> vector<256x1xf32>
    %84 = vector.broadcast %83 : vector<256x1xf32> to vector<256x256xf32>
    %85 = arith.mulf %80, %84 : vector<256x256xf32>
    %86 = arith.truncf %85 : vector<256x256xf32> to vector<256x256xbf16>
    %87 = arith.truncf %72 : vector<32x256xf32> to vector<32x256xbf16>
    %cst_60 = arith.constant dense<0.000000e+00> : vector<32x256xf32>
    %88 = tpu.matmul %87, %86, %cst_60 {dimension_numbers = #tpu.dot_dimension_numbers<[1], [0], [0], [1], [0, 0, 1, 1], [], []>} : vector<32x256xbf16>, vector<256x256xbf16>, vector<32x256xf32> -> vector<32x256xf32>
    %c0_61 = arith.constant 0 : index
    %89 = memref.load %arg11[%c0_61] : memref<1xf32, #tpu.memory_space<smem>>
    %90 = vector.broadcast %89 : f32 to vector<32x256xf32>
    %91 = arith.mulf %90, %88 : vector<32x256xf32>
    %92 = arith.addf %91, %1 : vector<32x256xf32>
    %c0_62 = arith.constant 0 : index
    %c0_63 = arith.constant 0 : index
    %c0_64 = arith.constant 0 : index
    %93 = vector.load %arg12[%c0_62, %c0_63, %c0_64] : memref<1x32x256xf32, #tpu.memory_space<vmem>>, vector<1x32x256xf32>
    %94 = vector.shape_cast %93 : vector<1x32x256xf32> to vector<32x256xf32>
    %95 = vector.shape_cast %92 : vector<32x256xf32> to vector<1x32x256xf32>
    tpu.vector_store %arg12[%c0_62, %c0_63, %c0_64], %95 {strides = array<i32>} : memref<1x32x256xf32, #tpu.memory_space<vmem>>, vector<1x32x256xf32>,
    return
  }
  func.func @transform_0(%arg0: i32) -> (i32, i32, i32) {
    %c0_i32 = arith.constant 0 : i32
    %c0_i32_0 = arith.constant 0 : i32
    %c0_i32_1 = arith.constant 0 : i32
    return %arg0, %c0_i32, %c0_i32_0 : i32, i32, i32
  }
  func.func @transform_1(%arg0: i32) -> (i32, i32) {
    %c0_i32 = arith.constant 0 : i32
    %c0_i32_0 = arith.constant 0 : i32
    %c0_i32_1 = arith.constant 0 : i32
    return %c0_i32, %c0_i32_0 : i32, i32
  }
  func.func @transform_2(%arg0: i32) -> (i32, i32, i32) {
    %c0_i32 = arith.constant 0 : i32
    %c0_i32_0 = arith.constant 0 : i32
    %c0_i32_1 = arith.constant 0 : i32
    %c0_i32_2 = arith.constant 0 : i32
    return %c0_i32, %c0_i32_0, %c0_i32_1 : i32, i32, i32
  }
  func.func @transform_3(%arg0: i32) -> (i32, i32, i32) {
    %c0_i32 = arith.constant 0 : i32
    %c0_i32_0 = arith.constant 0 : i32
    %c0_i32_1 = arith.constant 0 : i32
    %c0_i32_2 = arith.constant 0 : i32
    return %c0_i32, %c0_i32_0, %c0_i32_1 : i32, i32, i32
  }
  func.func @transform_4(%arg0: i32) -> (i32, i32, i32) {
    %c0_i32 = arith.constant 0 : i32
    %c0_i32_0 = arith.constant 0 : i32
    %c0_i32_1 = arith.constant 0 : i32
    %c0_i32_2 = arith.constant 0 : i32
    return %c0_i32, %c0_i32_0, %c0_i32_1 : i32, i32, i32
  }
  func.func @transform_5(%arg0: i32) -> (i32, i32) {
    %c0_i32 = arith.constant 0 : i32
    %c0_i32_0 = arith.constant 0 : i32
    %c0_i32_1 = arith.constant 0 : i32
    return %c0_i32, %c0_i32_0 : i32, i32
  }
  func.func @transform_6(%arg0: i32) -> (i32, i32) {
    %c0_i32 = arith.constant 0 : i32
    %c0_i32_0 = arith.constant 0 : i32
    %c0_i32_1 = arith.constant 0 : i32
    return %c0_i32, %c0_i32_0 : i32, i32
  }
  func.func @transform_7(%arg0: i32) -> (i32, i32) {
    %c0_i32 = arith.constant 0 : i32
    %c0_i32_0 = arith.constant 0 : i32
    %c0_i32_1 = arith.constant 0 : i32
    return %c0_i32, %c0_i32_0 : i32, i32
  }
  func.func @transform_8(%arg0: i32) -> (i32, i32) {
    %c0_i32 = arith.constant 0 : i32
    %c0_i32_0 = arith.constant 0 : i32
    %c0_i32_1 = arith.constant 0 : i32
    return %c0_i32, %c0_i32_0 : i32, i32
  }
  func.func @transform_9(%arg0: i32) -> (i32, i32) {
    %c0_i32 = arith.constant 0 : i32
    %c0_i32_0 = arith.constant 0 : i32
    %c0_i32_1 = arith.constant 0 : i32
    return %c0_i32, %c0_i32_0 : i32, i32
  }
  func.func @transform_10(%arg0: i32) -> i32 {
    %c0_i32 = arith.constant 0 : i32
    %c0_i32_0 = arith.constant 0 : i32
    return %c0_i32 : i32
  }
  func.func @transform_11(%arg0: i32) -> (i32, i32, i32) {
    %c0_i32 = arith.constant 0 : i32
    %c0_i32_0 = arith.constant 0 : i32
    %c0_i32_1 = arith.constant 0 : i32
    return %arg0, %c0_i32, %c0_i32_0 : i32, i32, i32
  }
}

</mosaic_0001>

<llo_original>
// kernel: tpu_custom_call.1
$region0: #{tpu_custom_call.1}
  #allocation0 [shape = 'u32[]', space=smem, size = 0x4, offset = 0x4, fixed_abs, tag = 'smem constant byte address 0x4 - core index']
  #allocation1 [shape = 'u32[144,128]{1,0:T(1,128)}', space=vmem, size = 0x12000, scoped, tag = 'internal scratch']
  #allocation2 [shape = 'f32[1]{0:T(128)S(6)}', space=smem, size = 0x200, scoped, tag = 'scoped memory for tpu_custom_call.1']
  %s0 = inlined_call_operand.hbm [shape: f32[2,32,256], index: 0, kind: input, shape index: {}]
  %s1 = inlined_call_operand.vmem [shape: f32[6,256], index: 1, kind: input, shape index: {}]
  %s2 = inlined_call_operand.hbm [shape: f32[3,4,32], index: 2, kind: input, shape index: {}]
  %s3 = inlined_call_operand.hbm [shape: f32[3,4,32], index: 3, kind: input, shape index: {}]
  %s4 = inlined_call_operand.hbm [shape: f32[3,4,32], index: 4, kind: input, shape index: {}]
  %s5 = inlined_call_operand.vmem [shape: f32[32,32], index: 5, kind: input, shape index: {}]
  %s6 = inlined_call_operand.vmem [shape: f32[4,1], index: 6, kind: input, shape index: {}]
  %s7 = inlined_call_operand.vmem [shape: f32[4,1], index: 7, kind: input, shape index: {}]
  %s8 = inlined_call_operand.vmem [shape: f32[4,1], index: 8, kind: input, shape index: {}]
  %s9 = inlined_call_operand.vmem [shape: f32[32,1], index: 9, kind: input, shape index: {}]
  %s10 = inlined_call_operand.<no memory space> [shape: f32[1], index: 10, kind: input, shape index: {}]
  %s11 = inlined_call_operand.hbm [shape: f32[2,32,256], index: 11, kind: output, shape index: {}]
  %s12 = sld [smem:[#allocation0]]
  $region93: #{tpu_custom_call.1} parent=0
    _
  %s14 = ssub.s32 1, %s12
  %s15 = scalar_select 0, %s14, %s12
  %16 = sst [smem:[#allocation2]] %s10
  $region1: #{tpu_custom_call.1} parent=0
    #allocation3 [shape = 'u8[65536]{0}', space=vmem, size = 0x10000, scoped, tag = 'input window, operand 0']
    #allocation4 [shape = 's32[2]{0}', space=sflag, size = 0x8, scoped, tag = 'scoped memory for tpu_custom_call.1']
    #allocation5 [shape = 's32[2]{0}', space=sflag, size = 0x8, scoped, tag = 'scoped memory for tpu_custom_call.1']
    #allocation6 [shape = 'u8[6144]{0}', space=vmem, size = 0x1800, scoped, tag = 'input window, operand 2, single buffered']
    #allocation7 [shape = 's32[1]{0}', space=sflag, size = 0x4, scoped, tag = 'scoped memory for tpu_custom_call.1']
    #allocation8 [shape = 'u8[6144]{0}', space=vmem, size = 0x1800, scoped, tag = 'input window, operand 3, single buffered']
    #allocation9 [shape = 'u8[6144]{0}', space=vmem, size = 0x1800, scoped, tag = 'input window, operand 4, single buffered']
    #allocation10 [shape = 's32[1]{0}', space=sflag, size = 0x4, scoped, tag = 'scoped memory for tpu_custom_call.1']
    #allocation11 [shape = 'u8[65536]{0}', space=vmem, size = 0x10000, scoped, tag = 'output window, operand 0']
    %17 = vsyncpa [#allocation4], 0
    %s18 = scalar_lea.sflag [#allocation4], 1
    %19 = vsyncpa %s18, 0
    %20 = vsyncpa [#allocation7], 0
    %21 = vsyncpa [#allocation10], 0
    %22 = vsyncpa [#allocation5], 0
    %s23 = scalar_lea.sflag [#allocation5], 1
    %24 = vsyncpa %s23, 0
    loop: start=0, step=1, limit=4
    $region2: #{tpu_custom_call.1} parent=1 // loop_pre_header
      _
    $region3: #{tpu_custom_call.1} parent=1 // loop_header
      %s26 = sphi 0, %s30
      %p27 = scmp.ge.s32.totalorder %s26, 4
      %s36 = sphi 0, %s38
      %s39 = sphi 0, %s36
      %s40 = sphi 0, %s39
      %s56 = sphi 0, %s40
      %s60 = sphi 0, %s60
      %s62 = sphi 0, %s60
      %s63 = sphi 0, %s62
      %s77 = sphi 0, %s63
      %s81 = sphi 0, %s81
      %s83 = sphi 0, %s81
      %s84 = sphi 0, %s83
      %s98 = sphi 0, %s84
      %s102 = sphi 0, %s102
      %s104 = sphi 0, %s102
      %s105 = sphi 0, %s104
      %s119 = sphi 0, %s105
      %s123 = sphi 0, %s123
      %s125 = sphi 0, %s123
      %s126 = sphi 0, %s125
      %s140 = sphi 0, %s126
      %s144 = sphi 0, %s144
      %s146 = sphi 0, %s144
      %s147 = sphi 0, %s146
      %s161 = sphi 0, %s147
      %s165 = sphi 0, %s165
      %s167 = sphi 0, %s165
      %s168 = sphi 0, %s167
      %s182 = sphi 0, %s168
      %s186 = sphi 0, %s186
      %s188 = sphi 0, %s186
      %s189 = sphi 0, %s188
      %s203 = sphi 0, %s189
      %s207 = sphi 0, %s207
      %s209 = sphi 0, %s207
      %s210 = sphi 0, %s209
      %s224 = sphi 0, %s210
      %s228 = sphi 0, %s228
      %s230 = sphi 0, %s228
      %s231 = sphi 0, %s230
      %s245 = sphi 0, %s231
      %s249 = sphi 0, %s249
      %s251 = sphi 0, %s249
      %s252 = sphi 0, %s251
      %s266 = sphi 0, %s252
      %s272 = sphi 0, %s274
      %s275 = sphi 0, %s272
      %s276 = sphi 0, %s275
      %s292 = sphi 0, %s276
    $region4: #{tpu_custom_call.1} parent=1 // loop_header_branch
      %29 = sbr.rel (%p27) target = $region8
    $region5: #{tpu_custom_call.1} parent=1 // loop_body
      %s31 = ssub.s32 %s26, 1
      %s32 = ssub.s32 %s26, 2
      %s33 = sadd.s32 %s26, 1
      %s34 = ssub.s32 %s26, %s33
      %p35 = scmp.eq.s32.totalorder %s34, 0
      %s37 = sadd.s32 %s36, 1
      %s38 = scalar_select %p35, %s36, %s37
      %p41 = pneg %p35
      %p42 = scmp.eq.s32.totalorder %s26, 1
      %p43 = por %p41, %p42
      %p44 = scmp.ne.s32.totalorder %s36, %s39
      %p45 = scmp.eq.s32.totalorder %s26, 0
      %p46 = por %p44, %p45
      %p47 = scmp.ne.s32.totalorder %s36, %s39
      %p48 = scmp.eq.s32.totalorder %s31, 1
      %p49 = por %p47, %p48
      %p50 = scmp.ne.s32.totalorder %s39, %s40
      %p51 = scmp.eq.s32.totalorder %s31, 0
      %p52 = por %p50, %p51
      %p53 = scmp.ne.s32.totalorder %s39, %s40
      %p54 = scmp.eq.s32.totalorder %s32, 1
      %p55 = por %p53, %p54
      %p57 = scmp.ne.s32.totalorder %s40, %s56
      %p58 = scmp.eq.s32.totalorder %s32, 0
      %p59 = por %p57, %p58
      %s61 = sadd.s32 %s60, 1
      %p64 = scmp.eq.s32.totalorder %s26, 1
      %p65 = scmp.ne.s32.totalorder %s60, %s62
      %p66 = scmp.eq.s32.totalorder %s26, 0
      %p67 = por %p65, %p66
      %p68 = scmp.ne.s32.totalorder %s60, %s62
      %p69 = scmp.eq.s32.totalorder %s31, 1
      %p70 = por %p68, %p69
      %p71 = scmp.ne.s32.totalorder %s62, %s63
      %p72 = scmp.eq.s32.totalorder %s31, 0
      %p73 = por %p71, %p72
      %p74 = scmp.ne.s32.totalorder %s62, %s63
      %p75 = scmp.eq.s32.totalorder %s32, 1
      %p76 = por %p74, %p75
      %p78 = scmp.ne.s32.totalorder %s63, %s77
      %p79 = scmp.eq.s32.totalorder %s32, 0
      %p80 = por %p78, %p79
      %s82 = sadd.s32 %s81, 1
      %p85 = scmp.eq.s32.totalorder %s26, 1
      %p86 = scmp.ne.s32.totalorder %s81, %s83
      %p87 = scmp.eq.s32.totalorder %s26, 0
      %p88 = por %p86, %p87
      %p89 = scmp.ne.s32.totalorder %s81, %s83
      %p90 = scmp.eq.s32.totalorder %s31, 1
      %p91 = por %p89, %p90
      %p92 = scmp.ne.s32.totalorder %s83, %s84
      %p93 = scmp.eq.s32.totalorder %s31, 0
      %p94 = por %p92, %p93
      %p95 = scmp.ne.s32.totalorder %s83, %s84
      %p96 = scmp.eq.s32.totalorder %s32, 1
      %p97 = por %p95, %p96
      %p99 = scmp.ne.s32.totalorder %s84, %s98
      %p100 = scmp.eq.s32.totalorder %s32, 0
      %p101 = por %p99, %p100
      %s103 = sadd.s32 %s102, 1
      %p106 = scmp.eq.s32.totalorder %s26, 1
      %p107 = scmp.ne.s32.totalorder %s102, %s104
      %p108 = scmp.eq.s32.totalorder %s26, 0
      %p109 = por %p107, %p108
      %p110 = scmp.ne.s32.totalorder %s102, %s104
      %p111 = scmp.eq.s32.totalorder %s31, 1
      %p112 = por %p110, %p111
      %p113 = scmp.ne.s32.totalorder %s104, %s105
      %p114 = scmp.eq.s32.totalorder %s31, 0
      %p115 = por %p113, %p114
      %p116 = scmp.ne.s32.totalorder %s104, %s105
      %p117 = scmp.eq.s32.totalorder %s32, 1
      %p118 = por %p116, %p117
      %p120 = scmp.ne.s32.totalorder %s105, %s119
      %p121 = scmp.eq.s32.totalorder %s32, 0
      %p122 = por %p120, %p121
      %s124 = sadd.s32 %s123, 1
      %p127 = scmp.eq.s32.totalorder %s26, 1
      %p128 = scmp.ne.s32.totalorder %s123, %s125
      %p129 = scmp.eq.s32.totalorder %s26, 0
      %p130 = por %p128, %p129
      %p131 = scmp.ne.s32.totalorder %s123, %s125
      %p132 = scmp.eq.s32.totalorder %s31, 1
      %p133 = por %p131, %p132
      %p134 = scmp.ne.s32.totalorder %s125, %s126
      %p135 = scmp.eq.s32.totalorder %s31, 0
      %p136 = por %p134, %p135
      %p137 = scmp.ne.s32.totalorder %s125, %s126
      %p138 = scmp.eq.s32.totalorder %s32, 1
      %p139 = por %p137, %p138
      %p141 = scmp.ne.s32.totalorder %s126, %s140
      %p142 = scmp.eq.s32.totalorder %s32, 0
      %p143 = por %p141, %p142
      %s145 = sadd.s32 %s144, 1
      %p148 = scmp.eq.s32.totalorder %s26, 1
      %p149 = scmp.ne.s32.totalorder %s144, %s146
      %p150 = scmp.eq.s32.totalorder %s26, 0
      %p151 = por %p149, %p150
      %p152 = scmp.ne.s32.totalorder %s144, %s146
      %p153 = scmp.eq.s32.totalorder %s31, 1
      %p154 = por %p152, %p153
      %p155 = scmp.ne.s32.totalorder %s146, %s147
      %p156 = scmp.eq.s32.totalorder %s31, 0
      %p157 = por %p155, %p156
      %p158 = scmp.ne.s32.totalorder %s146, %s147
      %p159 = scmp.eq.s32.totalorder %s32, 1
      %p160 = por %p158, %p159
      %p162 = scmp.ne.s32.totalorder %s147, %s161
      %p163 = scmp.eq.s32.totalorder %s32, 0
      %p164 = por %p162, %p163
      %s166 = sadd.s32 %s165, 1
      %p169 = scmp.eq.s32.totalorder %s26, 1
      %p170 = scmp.ne.s32.totalorder %s165, %s167
      %p171 = scmp.eq.s32.totalorder %s26, 0
      %p172 = por %p170, %p171
      %p173 = scmp.ne.s32.totalorder %s165, %s167
      %p174 = scmp.eq.s32.totalorder %s31, 1
      %p175 = por %p173, %p174
      %p176 = scmp.ne.s32.totalorder %s167, %s168
      %p177 = scmp.eq.s32.totalorder %s31, 0
      %p178 = por %p176, %p177
      %p179 = scmp.ne.s32.totalorder %s167, %s168
      %p180 = scmp.eq.s32.totalorder %s32, 1
      %p181 = por %p179, %p180
      %p183 = scmp.ne.s32.totalorder %s168, %s182
      %p184 = scmp.eq.s32.totalorder %s32, 0
      %p185 = por %p183, %p184
      %s187 = sadd.s32 %s186, 1
      %p190 = scmp.eq.s32.totalorder %s26, 1
      %p191 = scmp.ne.s32.totalorder %s186, %s188
      %p192 = scmp.eq.s32.totalorder %s26, 0
      %p193 = por %p191, %p192
      %p194 = scmp.ne.s32.totalorder %s186, %s188
      %p195 = scmp.eq.s32.totalorder %s31, 1
      %p196 = por %p194, %p195
      %p197 = scmp.ne.s32.totalorder %s188, %s189
      %p198 = scmp.eq.s32.totalorder %s31, 0
      %p199 = por %p197, %p198
      %p200 = scmp.ne.s32.totalorder %s188, %s189
      %p201 = scmp.eq.s32.totalorder %s32, 1
      %p202 = por %p200, %p201
      %p204 = scmp.ne.s32.totalorder %s189, %s203
      %p205 = scmp.eq.s32.totalorder %s32, 0
      %p206 = por %p204, %p205
      %s208 = sadd.s32 %s207, 1
      %p211 = scmp.eq.s32.totalorder %s26, 1
      %p212 = scmp.ne.s32.totalorder %s207, %s209
      %p213 = scmp.eq.s32.totalorder %s26, 0
      %p214 = por %p212, %p213
      %p215 = scmp.ne.s32.totalorder %s207, %s209
      %p216 = scmp.eq.s32.totalorder %s31, 1
      %p217 = por %p215, %p216
      %p218 = scmp.ne.s32.totalorder %s209, %s210
      %p219 = scmp.eq.s32.totalorder %s31, 0
      %p220 = por %p218, %p219
      %p221 = scmp.ne.s32.totalorder %s209, %s210
      %p222 = scmp.eq.s32.totalorder %s32, 1
      %p223 = por %p221, %p222
      %p225 = scmp.ne.s32.totalorder %s210, %s224
      %p226 = scmp.eq.s32.totalorder %s32, 0
      %p227 = por %p225, %p226
      %s229 = sadd.s32 %s228, 1
      %p232 = scmp.eq.s32.totalorder %s26, 1
      %p233 = scmp.ne.s32.totalorder %s228, %s230
      %p234 = scmp.eq.s32.totalorder %s26, 0
      %p235 = por %p233, %p234
      %p236 = scmp.ne.s32.totalorder %s228, %s230
      %p237 = scmp.eq.s32.totalorder %s31, 1
      %p238 = por %p236, %p237
      %p239 = scmp.ne.s32.totalorder %s230, %s231
      %p240 = scmp.eq.s32.totalorder %s31, 0
      %p241 = por %p239, %p240
      %p242 = scmp.ne.s32.totalorder %s230, %s231
      %p243 = scmp.eq.s32.totalorder %s32, 1
      %p244 = por %p242, %p243
      %p246 = scmp.ne.s32.totalorder %s231, %s245
      %p247 = scmp.eq.s32.totalorder %s32, 0
      %p248 = por %p246, %p247
      %s250 = sadd.s32 %s249, 1
      %p253 = scmp.eq.s32.totalorder %s26, 1
      %p254 = scmp.ne.s32.totalorder %s249, %s251
      %p255 = scmp.eq.s32.totalorder %s26, 0
      %p256 = por %p254, %p255
      %p257 = scmp.ne.s32.totalorder %s249, %s251
      %p258 = scmp.eq.s32.totalorder %s31, 1
      %p259 = por %p257, %p258
      %p260 = scmp.ne.s32.totalorder %s251, %s252
      %p261 = scmp.eq.s32.totalorder %s31, 0
      %p262 = por %p260, %p261
      %p263 = scmp.ne.s32.totalorder %s251, %s252
      %p264 = scmp.eq.s32.totalorder %s32, 1
      %p265 = por %p263, %p264
      %p267 = scmp.ne.s32.totalorder %s252, %s266
      %p268 = scmp.eq.s32.totalorder %s32, 0
      %p269 = por %p267, %p268
      %s270 = ssub.s32 %s26, %s33
      %p271 = scmp.eq.s32.totalorder %s270, 0
      %s273 = sadd.s32 %s272, 1
      %s274 = scalar_select %p271, %s272, %s273
      %p277 = pneg %p271
      %p278 = scmp.eq.s32.totalorder %s26, 1
      %p279 = por %p277, %p278
      %p280 = scmp.ne.s32.totalorder %s272, %s275
      %p281 = scmp.eq.s32.totalorder %s26, 0
      %p282 = por %p280, %p281
      %p283 = scmp.ne.s32.totalorder %s272, %s275
      %p284 = scmp.eq.s32.totalorder %s31, 1
      %p285 = por %p283, %p284
      %p286 = scmp.ne.s32.totalorder %s275, %s276
      %p287 = scmp.eq.s32.totalorder %s31, 0
      %p288 = por %p286, %p287
      %p289 = scmp.ne.s32.totalorder %s275, %s276
      %p290 = scmp.eq.s32.totalorder %s32, 1
      %p291 = por %p289, %p290
      %p293 = scmp.ne.s32.totalorder %s276, %s292
      %p294 = scmp.eq.s32.totalorder %s32, 0
      %p295 = por %p293, %p294
      %p296 = scmp.le.s32.totalorder 1, %s26
      %p297 = scmp.lt.s32.totalorder %s26, 3
      %p298 = pnand %p296, %p297
      %p299 = pneg %p298
      // Predicated region
      $region9: #{tpu_custom_call.1} parent=5 // pred_check
        _
      $region10: #{tpu_custom_call.1} parent=5 // pred_check_branch
        %301 = sbr.rel (%p298) target = $region12
      $region11: #{tpu_custom_call.1} parent=5 // pred_region
        %s302 = ssub.s32 %s26, 1
        // Predicated region
        $region13: #{tpu_custom_call.1} parent=11 // pred_check
          %p303 = pneg %p73
        $region14: #{tpu_custom_call.1} parent=11 // pred_check_branch
          %305 = sbr.rel (%p303) target = $region16
        $region15: #{tpu_custom_call.1} parent=11 // pred_region
          _
        $region16: #{tpu_custom_call.1} parent=11 // pred_fallthru
          _
        // Predicated region
        $region17: #{tpu_custom_call.1} parent=11 // pred_check
          %p306 = pneg %p94
        $region18: #{tpu_custom_call.1} parent=11 // pred_check_branch
          %308 = sbr.rel (%p306) target = $region20
        $region19: #{tpu_custom_call.1} parent=11 // pred_region
          %s310 = ssub.s32 192, 192
          %311 = vsyncadd [#allocation7], %s310
          %s312 = sshll.u32 [#allocation6], 4
          %s313 = int_to_ptr.vmem [resolvable:$true] %s312
          %318 = dma.hbm_to_vmem [thread:$0]  %s2, 192, %s313, [#allocation7], 64, 64, 4
        $region20: #{tpu_custom_call.1} parent=11 // pred_fallthru
          _
        // Predicated region
        $region21: #{tpu_custom_call.1} parent=11 // pred_check
          %p319 = pneg %p115
        $region22: #{tpu_custom_call.1} parent=11 // pred_check_branch
          %321 = sbr.rel (%p319) target = $region24
        $region23: #{tpu_custom_call.1} parent=11 // pred_region
          %s323 = ssub.s32 192, 192
          %324 = vsyncadd [#allocation7], %s323
          %s325 = sshll.u32 [#allocation8], 4
          %s326 = int_to_ptr.vmem [resolvable:$true] %s325
          %331 = dma.hbm_to_vmem [thread:$0]  %s3, 192, %s326, [#allocation7], 64, 64, 4
        $region24: #{tpu_custom_call.1} parent=11 // pred_fallthru
          _
        // Predicated region
        $region25: #{tpu_custom_call.1} parent=11 // pred_check
          %p332 = pneg %p136
        $region26: #{tpu_custom_call.1} parent=11 // pred_check_branch
          %334 = sbr.rel (%p332) target = $region28
        $region27: #{tpu_custom_call.1} parent=11 // pred_region
          %s336 = ssub.s32 192, 192
          %337 = vsyncadd [#allocation10], %s336
          %s338 = sshll.u32 [#allocation9], 4
          %s339 = int_to_ptr.vmem [resolvable:$true] %s338
          %344 = dma.hbm_to_vmem [thread:$0]  %s4, 192, %s339, [#allocation10], 64, 64, 4
        $region28: #{tpu_custom_call.1} parent=11 // pred_fallthru
          _
        // Predicated region
        $region29: #{tpu_custom_call.1} parent=11 // pred_check
          %p345 = pneg %p157
        $region30: #{tpu_custom_call.1} parent=11 // pred_check_branch
          %347 = sbr.rel (%p345) target = $region32
        $region31: #{tpu_custom_call.1} parent=11 // pred_region
          _
        $region32: #{tpu_custom_call.1} parent=11 // pred_fallthru
          _
        // Predicated region
        $region33: #{tpu_custom_call.1} parent=11 // pred_check
          %p348 = pneg %p178
        $region34: #{tpu_custom_call.1} parent=11 // pred_check_branch
          %350 = sbr.rel (%p348) target = $region36
        $region35: #{tpu_custom_call.1} parent=11 // pred_region
          _
        $region36: #{tpu_custom_call.1} parent=11 // pred_fallthru
          _
        // Predicated region
        $region37: #{tpu_custom_call.1} parent=11 // pred_check
          %p351 = pneg %p199
        $region38: #{tpu_custom_call.1} parent=11 // pred_check_branch
          %353 = sbr.rel (%p351) target = $region40
        $region39: #{tpu_custom_call.1} parent=11 // pred_region
          _
        $region40: #{tpu_custom_call.1} parent=11 // pred_fallthru
          _
        // Predicated region
        $region41: #{tpu_custom_call.1} parent=11 // pred_check
          %p354 = pneg %p220
        $region42: #{tpu_custom_call.1} parent=11 // pred_check_branch
          %356 = sbr.rel (%p354) target = $region44
        $region43: #{tpu_custom_call.1} parent=11 // pred_region
          _
        $region44: #{tpu_custom_call.1} parent=11 // pred_fallthru
          _
        // Predicated region
        $region45: #{tpu_custom_call.1} parent=11 // pred_check
          %p357 = pneg %p241
        $region46: #{tpu_custom_call.1} parent=11 // pred_check_branch
          %359 = sbr.rel (%p357) target = $region48
        $region47: #{tpu_custom_call.1} parent=11 // pred_region
          _
        $region48: #{tpu_custom_call.1} parent=11 // pred_fallthru
          _
        // Predicated region
        $region49: #{tpu_custom_call.1} parent=11 // pred_check
          %p360 = pneg %p262
        $region50: #{tpu_custom_call.1} parent=11 // pred_check_branch
          %362 = sbr.rel (%p360) target = $region52
        $region51: #{tpu_custom_call.1} parent=11 // pred_region
          _
        $region52: #{tpu_custom_call.1} parent=11 // pred_fallthru
          _
      $region12: #{tpu_custom_call.1} parent=5 // pred_fallthru
        _
      %p363 = scmp.lt.s32.totalorder %s26, 2
      // Predicated region
      $region53: #{tpu_custom_call.1} parent=5 // pred_check
        %p364 = pneg %p363
      $region54: #{tpu_custom_call.1} parent=5 // pred_check_branch
        %366 = sbr.rel (%p364) target = $region56
      $region55: #{tpu_custom_call.1} parent=5 // pred_region
        // Predicated region
        $region57: #{tpu_custom_call.1} parent=55 // pred_check
          %p367 = pneg %p46
        $region58: #{tpu_custom_call.1} parent=55 // pred_check_branch
          %369 = sbr.rel (%p367) target = $region60
        $region59: #{tpu_custom_call.1} parent=55 // pred_region
          %s370 = sand.u32 %s36, 1
          %s371 = scalar_lea.sflag [#allocation4], %s370
          %s372 = sand.u32 %s36, 1
          %s373 = smul.addr %s372, 64
          %s374 = scalar_lea.vmem [#allocation3], %s373
          %s376 = ssub.s32 1024, 1024
          %377 = vsyncadd %s371, %s376
          %s378 = smul.addr %s26, 8
          %s379 = smul.addr %s378, 128
          %s380 = scalar_lea.hbm %s0, %s379
          %s381 = sshll.u32 %s374, 4
          %s382 = int_to_ptr.vmem [resolvable:$true] %s381
          %387 = dma.hbm_to_vmem [thread:$0]  %s380, 1024, %s382, %s371, 256, 256, 16
        $region60: #{tpu_custom_call.1} parent=55 // pred_fallthru
          _
      $region56: #{tpu_custom_call.1} parent=5 // pred_fallthru
        _
      %p388 = scmp.le.s32.totalorder 1, %s26
      %p389 = scmp.lt.s32.totalorder %s26, 3
      %p390 = pnand %p388, %p389
      %p391 = pneg %p390
      // Predicated region
      $region61: #{tpu_custom_call.1} parent=5 // pred_check
        _
      $region62: #{tpu_custom_call.1} parent=5 // pred_check_branch
        %393 = sbr.rel (%p390) target = $region64
      $region63: #{tpu_custom_call.1} parent=5 // pred_region
        %s394 = ssub.s32 %s26, 1
        %s395 = sand.u32 %s39, 1
        %s396 = scalar_lea.sflag [#allocation4], %s395
        %s397 = sand.u32 %s39, 1
        %s398 = smul.addr %s397, 64
        %s399 = scalar_lea.vmem [#allocation3], %s398
        // Predicated region
        $region65: #{tpu_custom_call.1} parent=63 // pred_check
          %p400 = pneg %p52
        $region66: #{tpu_custom_call.1} parent=63 // pred_check_branch
          %402 = sbr.rel (%p400) target = $region68
        $region67: #{tpu_custom_call.1} parent=63 // pred_region
          %403 = dma.done %s396, 1024
        $region68: #{tpu_custom_call.1} parent=63 // pred_fallthru
          _
        // Predicated region
        $region69: #{tpu_custom_call.1} parent=63 // pred_check
          %p404 = pneg %p94
        $region70: #{tpu_custom_call.1} parent=63 // pred_check_branch
          %406 = sbr.rel (%p404) target = $region72
        $region71: #{tpu_custom_call.1} parent=63 // pred_region
          %407 = dma.done [#allocation7], 192
        $region72: #{tpu_custom_call.1} parent=63 // pred_fallthru
          _
        // Predicated region
        $region73: #{tpu_custom_call.1} parent=63 // pred_check
          %p408 = pneg %p115
        $region74: #{tpu_custom_call.1} parent=63 // pred_check_branch
          %410 = sbr.rel (%p408) target = $region76
        $region75: #{tpu_custom_call.1} parent=63 // pred_region
          %411 = dma.done [#allocation7], 192
        $region76: #{tpu_custom_call.1} parent=63 // pred_fallthru
          _
        // Predicated region
        $region77: #{tpu_custom_call.1} parent=63 // pred_check
          %p412 = pneg %p136
        $region78: #{tpu_custom_call.1} parent=63 // pred_check_branch
          %414 = sbr.rel (%p412) target = $region80
        $region79: #{tpu_custom_call.1} parent=63 // pred_region
          %415 = dma.done [#allocation10], 192
        $region80: #{tpu_custom_call.1} parent=63 // pred_fallthru
          _
        %s416 = sand.u32 %s39, 1
        %s417 = scalar_lea.sflag [#allocation4], %s416
        %s418 = sand.u32 %s39, 1
        %s419 = smul.addr %s418, 64
        %s420 = scalar_lea.vmem [#allocation3], %s419
        %p421 = pneg %p52
        %p422 = pneg %p49
        %p423 = pneg %p73
        %p424 = pneg %p70
        %p425 = pneg %p94
        %p426 = pneg %p91
        %p427 = pneg %p115
        %p428 = pneg %p112
        %p429 = pneg %p136
        %p430 = pneg %p133
        %p431 = pneg %p157
        %p432 = pneg %p154
        %p433 = pneg %p178
        %p434 = pneg %p175
        %p435 = pneg %p199
        %p436 = pneg %p196
        %p437 = pneg %p220
        %p438 = pneg %p217
        %p439 = pneg %p241
        %p440 = pneg %p238
        %p441 = pneg %p262
        %p442 = pneg %p259
        %p443 = pneg %p288
        %p444 = pneg %p285
        %s445 = sand.u32 %s275, 1
        %s446 = scalar_lea.sflag [#allocation5], %s445
        %s447 = sand.u32 %s275, 1
        %s448 = smul.addr %s447, 64
        %s449 = scalar_lea.vmem [#allocation11], %s448
        %v450 = vld [vmem:[%s399] sm:$0xff]
        %v451 = vld [vmem:[%s399 + $0x8] sm:$0xff]
        %v452 = vld [vmem:[%s399 + $0x10] sm:$0xff]
        %v453 = vld [vmem:[%s399 + $0x18] sm:$0xff]
        %v454 = vld [vmem:[%s399 + $0x20] sm:$0xff]
        %v455 = vld [vmem:[%s399 + $0x28] sm:$0xff]
        %v456 = vld [vmem:[%s399 + $0x30] sm:$0xff]
        %v457 = vld [vmem:[%s399 + $0x38] sm:$0xff]
        %v458 = vld [vmem:[%s1] ss:$8 sm:$0x3]
        %s459 = scalar_lea.vmem %s1, 1
        %v460 = vld [vmem:[%s459] ss:$8 sm:$0x3]
        %461 = vrot.lane.b32.xlu0 %v450, 4
        %v462 = vpop.permute.xlu0 %461
        %463 = vrot.lane.b32.xlu0 %v452, 4
        %v464 = vpop.permute.xlu0 %463
        %465 = vrot.lane.b32.xlu0 %v454, 4
        %v466 = vpop.permute.xlu0 %465
        %467 = vrot.lane.b32.xlu0 %v456, 4
        %v468 = vpop.permute.xlu0 %467
        %469 = vrot.lane.b32.xlu0 %v451, 4
        %v470 = vpop.permute.xlu0 %469
        %471 = vrot.lane.b32.xlu0 %v453, 4
        %v472 = vpop.permute.xlu0 %471
        %473 = vrot.lane.b32.xlu0 %v455, 4
        %v474 = vpop.permute.xlu0 %473
        %475 = vrot.lane.b32.xlu0 %v457, 4
        %v476 = vpop.permute.xlu0 %475
        %v477 = vlaneseq
        %v478 = vand.u32 %v477, 127
        %vm479 = vcmp.lt.s32.totalorder %v478, 4
        %v480 = vsel %vm479, %v462, %v470
        %v481 = vsel %vm479, %v464, %v472
        %v482 = vsel %vm479, %v466, %v474
        %v483 = vsel %vm479, %v468, %v476
        %v484 = vsel %vm479, %v470, %v462
        %v485 = vsel %vm479, %v472, %v464
        %v486 = vsel %vm479, %v474, %v466
        %v487 = vsel %vm479, %v476, %v468
        %488 = vrot.lane.b32.xlu0 %v450, 124
        %v489 = vpop.permute.xlu0 %488
        %490 = vrot.lane.b32.xlu0 %v452, 124
        %v491 = vpop.permute.xlu0 %490
        %492 = vrot.lane.b32.xlu0 %v454, 124
        %v493 = vpop.permute.xlu0 %492
        %494 = vrot.lane.b32.xlu0 %v456, 124
        %v495 = vpop.permute.xlu0 %494
        %496 = vrot.lane.b32.xlu0 %v451, 124
        %v497 = vpop.permute.xlu0 %496
        %498 = vrot.lane.b32.xlu0 %v453, 124
        %v499 = vpop.permute.xlu0 %498
        %500 = vrot.lane.b32.xlu0 %v455, 124
        %v501 = vpop.permute.xlu0 %500
        %502 = vrot.lane.b32.xlu0 %v457, 124
        %v503 = vpop.permute.xlu0 %502
        %vm504 = vcmp.lt.s32.totalorder %v478, 124
        %v505 = vsel %vm504, %v489, %v497
        %v506 = vsel %vm504, %v491, %v499
        %v507 = vsel %vm504, %v493, %v501
        %v508 = vsel %vm504, %v495, %v503
        %v509 = vsel %vm504, %v497, %v489
        %v510 = vsel %vm504, %v499, %v491
        %v511 = vsel %vm504, %v501, %v493
        %v512 = vsel %vm504, %v503, %v495
        %s513 = scalar_lea.vmem [#allocation6], 4
        %v514 = vld [vmem:[%s513] sm:$0xf]
        %v515 = vld [vmem:[#allocation6] sm:$0xf]
        %vm516 = vcmask 261120
        %v518 = vsel %vm516, %v515, 0
        %520 = vmatprep.subr.mxu0 0.0
        %521 = vmatpush1.msra.mxu0 0.0
        %522 = vmatprep.subr.mxu0 0.0
        %523 = vmatpush1.msra.mxu0 0.0
        %524 = vmatprep.subr.mxu0 0.0
        %525 = vmatpush1.msra.mxu0 0.0
        %526 = vmatprep.subr.mxu0 0.0
        %527 = vmatpush1.msra.mxu0 0.0
        %528 = vmatprep.subr.mxu0 0.0
        %529 = vmatpush1.msra.mxu0 0.0
        %530 = vmatprep.subr.mxu0 0.0
        %531 = vmatpush1.msra.mxu0 0.0
        %532 = vmatprep.subr.mxu0 0.0
        %533 = vmatpush1.msra.mxu0 0.0
        %534 = vmatprep.subr.mxu0 0.0
        %535 = vmatpush1.msra.mxu0 0.0
        %536 = vmatprep.subr.mxu0 0.0
        %537 = vmatpush1.msra.mxu0 0.0
        %538 = vmatprep.subr.mxu0 0.0
        %539 = vmatpush1.msra.mxu0 0.0
        %540 = vmatprep.subr.mxu0 0.0
        %541 = vmatpush1.msra.mxu0 0.0
        %542 = vmatprep.subr.mxu0 0.0
        %543 = vmatpush1.msra.mxu0 0.0
        %544 = vmatprep.subr.mxu0 %v483
        %545 = vmatpush1.msra.mxu0 %v487
        %546 = vmatprep.subr.mxu0 %v482
        %547 = vmatpush1.msra.mxu0 %v486
        %548 = vmatprep.subr.mxu0 %v481
        %549 = vmatpush1.msra.mxu0 %v485
        %550 = vmatprep.subr.mxu0 %v480
        %551 = vmatpush1.msra.mxu0 %v484
        %552 = vmatprep.subr.mxu0 0.0
        %553 = vmatpush2.msra.mxu0 0.0
        %554 = vmatprep.subr.mxu0 0.0
        %555 = vmatpush2.msra.mxu0 0.0
        %556 = vmatprep.subr.mxu0 0.0
        %557 = vmatpush2.msra.mxu0 0.0
        %558 = vmatprep.subr.mxu0 0.0
        %559 = vmatpush2.msra.mxu0 0.0
        %560 = vmatprep.subr.mxu0 0.0
        %561 = vmatpush2.msra.mxu0 0.0
        %562 = vmatprep.subr.mxu0 0.0
        %563 = vmatpush2.msra.mxu0 0.0
        %564 = vmatprep.subr.mxu0 0.0
        %565 = vmatpush2.msra.mxu0 0.0
        %566 = vmatprep.subr.mxu0 0.0
        %567 = vmatpush2.msra.mxu0 0.0
        %568 = vmatprep.subr.mxu0 0.0
        %569 = vmatpush2.msra.mxu0 0.0
        %570 = vmatprep.subr.mxu0 0.0
        %571 = vmatpush2.msra.mxu0 0.0
        %572 = vmatprep.subr.mxu0 0.0
        %573 = vmatpush2.msra.mxu0 0.0
        %574 = vmatprep.subr.mxu0 0.0
        %575 = vmatpush2.msra.mxu0 0.0
        %576 = vmatprep.subr.mxu0 0.0
        %577 = vmatpush2.msra.mxu0 0.0
        %578 = vmatprep.subr.mxu0 0.0
        %579 = vmatpush2.msra.mxu0 0.0
        %580 = vmatprep.subr.mxu0 0.0
        %581 = vmatpush2.msra.mxu0 0.0
        %582 = vmatprep.subr.mxu0 0.0
        %583 = vmatpush2.msra.mxu0 0.0
        %584 = vmatprep.mubr.f32.mxu0 0.0
        %585 = vmatmul.mubr.f32.gmra.mxu0 %v518
        %v586 = vpop.f32.mrf.mxu0
        %v587 = vadd.f32 0.0, %v586
        %v588 = vpop.f32.mrf.mxu0
        %v589 = vadd.f32 0.0, %v588
        %590 = vdwg.mxu0
        %v592 = vlaneseq
        %v593 = vshrl.u32 %v592, 7
        %v594 = vsub.s32 0, %v593
        %v595 = vrot.slane %v458, %v594
        %v596 = vlaneseq
        %v597 = vshrl.u32 %v596, 7
        %v598 = vsub.s32 1, %v597
        %v599 = vrot.slane %v458, %v598
        %v602 = vmul.f32 %v595, %v587
        %v603 = vmul.f32 %v599, %v589
        %v605 = vsel %vm516, %v514, 0
        %607 = vmatprep.subr.mxu0 0.0
        %608 = vmatpush1.msra.mxu0 0.0
        %609 = vmatprep.subr.mxu0 0.0
        %610 = vmatpush1.msra.mxu0 0.0
        %611 = vmatprep.subr.mxu0 0.0
        %612 = vmatpush1.msra.mxu0 0.0
        %613 = vmatprep.subr.mxu0 0.0
        %614 = vmatpush1.msra.mxu0 0.0
        %615 = vmatprep.subr.mxu0 0.0
        %616 = vmatpush1.msra.mxu0 0.0
        %617 = vmatprep.subr.mxu0 0.0
        %618 = vmatpush1.msra.mxu0 0.0
        %619 = vmatprep.subr.mxu0 0.0
        %620 = vmatpush1.msra.mxu0 0.0
        %621 = vmatprep.subr.mxu0 0.0
        %622 = vmatpush1.msra.mxu0 0.0
        %623 = vmatprep.subr.mxu0 0.0
        %624 = vmatpush1.msra.mxu0 0.0
        %625 = vmatprep.subr.mxu0 0.0
        %626 = vmatpush1.msra.mxu0 0.0
        %627 = vmatprep.subr.mxu0 0.0
        %628 = vmatpush1.msra.mxu0 0.0
        %629 = vmatprep.subr.mxu0 0.0
        %630 = vmatpush1.msra.mxu0 0.0
        %631 = vmatprep.subr.mxu0 %v457
        %632 = vmatpush1.msra.mxu0 %v456
        %633 = vmatprep.subr.mxu0 %v455
        %634 = vmatpush1.msra.mxu0 %v454
        %635 = vmatprep.subr.mxu0 %v453
        %636 = vmatpush1.msra.mxu0 %v452
        %637 = vmatprep.subr.mxu0 %v451
        %638 = vmatpush1.msra.mxu0 %v450
        %639 = vmatprep.subr.mxu0 0.0
        %640 = vmatpush2.msra.mxu0 0.0
        %641 = vmatprep.subr.mxu0 0.0
        %642 = vmatpush2.msra.mxu0 0.0
        %643 = vmatprep.subr.mxu0 0.0
        %644 = vmatpush2.msra.mxu0 0.0
        %645 = vmatprep.subr.mxu0 0.0
        %646 = vmatpush2.msra.mxu0 0.0
        %647 = vmatprep.subr.mxu0 0.0
        %648 = vmatpush2.msra.mxu0 0.0
        %649 = vmatprep.subr.mxu0 0.0
        %650 = vmatpush2.msra.mxu0 0.0
        %651 = vmatprep.subr.mxu0 0.0
        %652 = vmatpush2.msra.mxu0 0.0
        %653 = vmatprep.subr.mxu0 0.0
        %654 = vmatpush2.msra.mxu0 0.0
        %655 = vmatprep.subr.mxu0 0.0
        %656 = vmatpush2.msra.mxu0 0.0
        %657 = vmatprep.subr.mxu0 0.0
        %658 = vmatpush2.msra.mxu0 0.0
        %659 = vmatprep.subr.mxu0 0.0
        %660 = vmatpush2.msra.mxu0 0.0
        %661 = vmatprep.subr.mxu0 0.0
        %662 = vmatpush2.msra.mxu0 0.0
        %663 = vmatprep.subr.mxu0 0.0
        %664 = vmatpush2.msra.mxu0 0.0
        %665 = vmatprep.subr.mxu0 0.0
        %666 = vmatpush2.msra.mxu0 0.0
        %667 = vmatprep.subr.mxu0 0.0
        %668 = vmatpush2.msra.mxu0 0.0
        %669 = vmatprep.subr.mxu0 0.0
        %670 = vmatpush2.msra.mxu0 0.0
        %671 = vmatprep.mubr.f32.mxu0 0.0
        %672 = vmatmul.mubr.f32.gmra.mxu0 %v605
        %v673 = vpop.f32.mrf.mxu0
        %v674 = vadd.f32 %v602, %v673
        %v675 = vpop.f32.mrf.mxu0
        %v676 = vadd.f32 %v603, %v675
        %677 = vdwg.mxu0
        %s678 = scalar_lea.vmem [#allocation6], 8
        %v679 = vld [vmem:[%s678] sm:$0xf]
        %v681 = vsel %vm516, %v679, 0
        %683 = vmatprep.subr.mxu0 0.0
        %684 = vmatpush1.msra.mxu0 0.0
        %685 = vmatprep.subr.mxu0 0.0
        %686 = vmatpush1.msra.mxu0 0.0
        %687 = vmatprep.subr.mxu0 0.0
        %688 = vmatpush1.msra.mxu0 0.0
        %689 = vmatprep.subr.mxu0 0.0
        %690 = vmatpush1.msra.mxu0 0.0
        %691 = vmatprep.subr.mxu0 0.0
        %692 = vmatpush1.msra.mxu0 0.0
        %693 = vmatprep.subr.mxu0 0.0
        %694 = vmatpush1.msra.mxu0 0.0
        %695 = vmatprep.subr.mxu0 0.0
        %696 = vmatpush1.msra.mxu0 0.0
        %697 = vmatprep.subr.mxu0 0.0
        %698 = vmatpush1.msra.mxu0 0.0
        %699 = vmatprep.subr.mxu0 0.0
        %700 = vmatpush1.msra.mxu0 0.0
        %701 = vmatprep.subr.mxu0 0.0
        %702 = vmatpush1.msra.mxu0 0.0
        %703 = vmatprep.subr.mxu0 0.0
        %704 = vmatpush1.msra.mxu0 0.0
        %705 = vmatprep.subr.mxu0 0.0
        %706 = vmatpush1.msra.mxu0 0.0
        %707 = vmatprep.subr.mxu0 %v512
        %708 = vmatpush1.msra.mxu0 %v508
        %709 = vmatprep.subr.mxu0 %v511
        %710 = vmatpush1.msra.mxu0 %v507
        %711 = vmatprep.subr.mxu0 %v510
        %712 = vmatpush1.msra.mxu0 %v506
        %713 = vmatprep.subr.mxu0 %v509
        %714 = vmatpush1.msra.mxu0 %v505
        %715 = vmatprep.subr.mxu0 0.0
        %716 = vmatpush2.msra.mxu0 0.0
        %717 = vmatprep.subr.mxu0 0.0
        %718 = vmatpush2.msra.mxu0 0.0
        %719 = vmatprep.subr.mxu0 0.0
        %720 = vmatpush2.msra.mxu0 0.0
        %721 = vmatprep.subr.mxu0 0.0
        %722 = vmatpush2.msra.mxu0 0.0
        %723 = vmatprep.subr.mxu0 0.0
        %724 = vmatpush2.msra.mxu0 0.0
        %725 = vmatprep.subr.mxu0 0.0
        %726 = vmatpush2.msra.mxu0 0.0
        %727 = vmatprep.subr.mxu0 0.0
        %728 = vmatpush2.msra.mxu0 0.0
        %729 = vmatprep.subr.mxu0 0.0
        %730 = vmatpush2.msra.mxu0 0.0
        %731 = vmatprep.subr.mxu0 0.0
        %732 = vmatpush2.msra.mxu0 0.0
        %733 = vmatprep.subr.mxu0 0.0
        %734 = vmatpush2.msra.mxu0 0.0
        %735 = vmatprep.subr.mxu0 0.0
        %736 = vmatpush2.msra.mxu0 0.0
        %737 = vmatprep.subr.mxu0 0.0
        %738 = vmatpush2.msra.mxu0 0.0
        %739 = vmatprep.subr.mxu0 0.0
        %740 = vmatpush2.msra.mxu0 0.0
        %741 = vmatprep.subr.mxu0 0.0
        %742 = vmatpush2.msra.mxu0 0.0
        %743 = vmatprep.subr.mxu0 0.0
        %744 = vmatpush2.msra.mxu0 0.0
        %745 = vmatprep.subr.mxu0 0.0
        %746 = vmatpush2.msra.mxu0 0.0
        %747 = vmatprep.mubr.f32.mxu0 0.0
        %748 = vmatmul.mubr.f32.gmra.mxu0 %v681
        %v749 = vpop.f32.mrf.mxu0
        %v750 = vadd.f32 0.0, %v749
        %v751 = vpop.f32.mrf.mxu0
        %v752 = vadd.f32 0.0, %v751
        %753 = vdwg.mxu0
        %v755 = vlaneseq
        %v756 = vshrl.u32 %v755, 7
        %v757 = vsub.s32 0, %v756
        %v758 = vrot.slane %v460, %v757
        %v759 = vlaneseq
        %v760 = vshrl.u32 %v759, 7
        %v761 = vsub.s32 1, %v760
        %v762 = vrot.slane %v460, %v761
        %v765 = vmul.f32 %v758, %v750
        %v766 = vmul.f32 %v762, %v752
        %v767 = vadd.f32 %v674, %v765
        %v768 = vadd.f32 %v676, %v766
        %v769 = vld [vmem:[%s6] sm:$0xf]
        %771 = vset.pattern.permute.xlu0 0
        %772 = vperm.xlu0 %771, %v769
        %v773 = vpop.permute.xlu0 %772
        %v775 = vadd.f32 %v767, %v773
        %v776 = vadd.f32 %v768, %v773
        %s777 = scalar_lea.vmem %s1, 2
        %v778 = vld [vmem:[%s777] ss:$8 sm:$0x3]
        %s779 = scalar_lea.vmem %s1, 3
        %v780 = vld [vmem:[%s779] ss:$8 sm:$0x3]
        %781 = vrot.lane.b32.xlu0 %v450, 32
        %v782 = vpop.permute.xlu0 %781
        %783 = vrot.lane.b32.xlu0 %v452, 32
        %v784 = vpop.permute.xlu0 %783
        %785 = vrot.lane.b32.xlu0 %v454, 32
        %v786 = vpop.permute.xlu0 %785
        %787 = vrot.lane.b32.xlu0 %v456, 32
        %v788 = vpop.permute.xlu0 %787
        %789 = vrot.lane.b32.xlu0 %v451, 32
        %v790 = vpop.permute.xlu0 %789
        %791 = vrot.lane.b32.xlu0 %v453, 32
        %v792 = vpop.permute.xlu0 %791
        %793 = vrot.lane.b32.xlu0 %v455, 32
        %v794 = vpop.permute.xlu0 %793
        %795 = vrot.lane.b32.xlu0 %v457, 32
        %v796 = vpop.permute.xlu0 %795
        %vm797 = vcmp.lt.s32.totalorder %v478, 32
        %v798 = vsel %vm797, %v782, %v790
        %v799 = vsel %vm797, %v784, %v792
        %v800 = vsel %vm797, %v786, %v794
        %v801 = vsel %vm797, %v788, %v796
        %v802 = vsel %vm797, %v790, %v782
        %v803 = vsel %vm797, %v792, %v784
        %v804 = vsel %vm797, %v794, %v786
        %v805 = vsel %vm797, %v796, %v788
        %806 = vrot.lane.b32.xlu0 %v450, 96
        %v807 = vpop.permute.xlu0 %806
        %808 = vrot.lane.b32.xlu0 %v452, 96
        %v809 = vpop.permute.xlu0 %808
        %810 = vrot.lane.b32.xlu0 %v454, 96
        %v811 = vpop.permute.xlu0 %810
        %812 = vrot.lane.b32.xlu0 %v456, 96
        %v813 = vpop.permute.xlu0 %812
        %814 = vrot.lane.b32.xlu0 %v451, 96
        %v815 = vpop.permute.xlu0 %814
        %816 = vrot.lane.b32.xlu0 %v453, 96
        %v817 = vpop.permute.xlu0 %816
        %818 = vrot.lane.b32.xlu0 %v455, 96
        %v819 = vpop.permute.xlu0 %818
        %820 = vrot.lane.b32.xlu0 %v457, 96
        %v821 = vpop.permute.xlu0 %820
        %vm822 = vcmp.lt.s32.totalorder %v478, 96
        %v823 = vsel %vm822, %v807, %v815
        %v824 = vsel %vm822, %v809, %v817
        %v825 = vsel %vm822, %v811, %v819
        %v826 = vsel %vm822, %v813, %v821
        %v827 = vsel %vm822, %v815, %v807
        %v828 = vsel %vm822, %v817, %v809
        %v829 = vsel %vm822, %v819, %v811
        %v830 = vsel %vm822, %v821, %v813
        %s831 = scalar_lea.vmem [#allocation8], 4
        %v832 = vld [vmem:[%s831] sm:$0xf]
        %v833 = vld [vmem:[#allocation8] sm:$0xf]
        %v835 = vsel %vm516, %v833, 0
        %837 = vmatprep.subr.mxu0 0.0
        %838 = vmatpush1.msra.mxu0 0.0
        %839 = vmatprep.subr.mxu0 0.0
        %840 = vmatpush1.msra.mxu0 0.0
        %841 = vmatprep.subr.mxu0 0.0
        %842 = vmatpush1.msra.mxu0 0.0
        %843 = vmatprep.subr.mxu0 0.0
        %844 = vmatpush1.msra.mxu0 0.0
        %845 = vmatprep.subr.mxu0 0.0
        %846 = vmatpush1.msra.mxu0 0.0
        %847 = vmatprep.subr.mxu0 0.0
        %848 = vmatpush1.msra.mxu0 0.0
        %849 = vmatprep.subr.mxu0 0.0
        %850 = vmatpush1.msra.mxu0 0.0
        %851 = vmatprep.subr.mxu0 0.0
        %852 = vmatpush1.msra.mxu0 0.0
        %853 = vmatprep.subr.mxu0 0.0
        %854 = vmatpush1.msra.mxu0 0.0
        %855 = vmatprep.subr.mxu0 0.0
        %856 = vmatpush1.msra.mxu0 0.0
        %857 = vmatprep.subr.mxu0 0.0
        %858 = vmatpush1.msra.mxu0 0.0
        %859 = vmatprep.subr.mxu0 0.0
        %860 = vmatpush1.msra.mxu0 0.0
        %861 = vmatprep.subr.mxu0 %v801
        %862 = vmatpush1.msra.mxu0 %v805
        %863 = vmatprep.subr.mxu0 %v800
        %864 = vmatpush1.msra.mxu0 %v804
        %865 = vmatprep.subr.mxu0 %v799
        %866 = vmatpush1.msra.mxu0 %v803
        %867 = vmatprep.subr.mxu0 %v798
        %868 = vmatpush1.msra.mxu0 %v802
        %869 = vmatprep.subr.mxu0 0.0
        %870 = vmatpush2.msra.mxu0 0.0
        %871 = vmatprep.subr.mxu0 0.0
        %872 = vmatpush2.msra.mxu0 0.0
        %873 = vmatprep.subr.mxu0 0.0
        %874 = vmatpush2.msra.mxu0 0.0
        %875 = vmatprep.subr.mxu0 0.0
        %876 = vmatpush2.msra.mxu0 0.0
        %877 = vmatprep.subr.mxu0 0.0
        %878 = vmatpush2.msra.mxu0 0.0
        %879 = vmatprep.subr.mxu0 0.0
        %880 = vmatpush2.msra.mxu0 0.0
        %881 = vmatprep.subr.mxu0 0.0
        %882 = vmatpush2.msra.mxu0 0.0
        %883 = vmatprep.subr.mxu0 0.0
        %884 = vmatpush2.msra.mxu0 0.0
        %885 = vmatprep.subr.mxu0 0.0
        %886 = vmatpush2.msra.mxu0 0.0
        %887 = vmatprep.subr.mxu0 0.0
        %888 = vmatpush2.msra.mxu0 0.0
        %889 = vmatprep.subr.mxu0 0.0
        %890 = vmatpush2.msra.mxu0 0.0
        %891 = vmatprep.subr.mxu0 0.0
        %892 = vmatpush2.msra.mxu0 0.0
        %893 = vmatprep.subr.mxu0 0.0
        %894 = vmatpush2.msra.mxu0 0.0
        %895 = vmatprep.subr.mxu0 0.0
        %896 = vmatpush2.msra.mxu0 0.0
        %897 = vmatprep.subr.mxu0 0.0
        %898 = vmatpush2.msra.mxu0 0.0
        %899 = vmatprep.subr.mxu0 0.0
        %900 = vmatpush2.msra.mxu0 0.0
        %901 = vmatprep.mubr.f32.mxu0 0.0
        %902 = vmatmul.mubr.f32.gmra.mxu0 %v835
        %v903 = vpop.f32.mrf.mxu0
        %v904 = vadd.f32 0.0, %v903
        %v905 = vpop.f32.mrf.mxu0
        %v906 = vadd.f32 0.0, %v905
        %907 = vdwg.mxu0
        %v909 = vlaneseq
        %v910 = vshrl.u32 %v909, 7
        %v911 = vsub.s32 0, %v910
        %v912 = vrot.slane %v778, %v911
        %v913 = vlaneseq
        %v914 = vshrl.u32 %v913, 7
        %v915 = vsub.s32 1, %v914
        %v916 = vrot.slane %v778, %v915
        %v919 = vmul.f32 %v912, %v904
        %v920 = vmul.f32 %v916, %v906
        %v922 = vsel %vm516, %v832, 0
        %924 = vmatprep.subr.mxu0 0.0
        %925 = vmatpush1.msra.mxu0 0.0
        %926 = vmatprep.subr.mxu0 0.0
        %927 = vmatpush1.msra.mxu0 0.0
        %928 = vmatprep.subr.mxu0 0.0
        %929 = vmatpush1.msra.mxu0 0.0
        %930 = vmatprep.subr.mxu0 0.0
        %931 = vmatpush1.msra.mxu0 0.0
        %932 = vmatprep.subr.mxu0 0.0
        %933 = vmatpush1.msra.mxu0 0.0
        %934 = vmatprep.subr.mxu0 0.0
        %935 = vmatpush1.msra.mxu0 0.0
        %936 = vmatprep.subr.mxu0 0.0
        %937 = vmatpush1.msra.mxu0 0.0
        %938 = vmatprep.subr.mxu0 0.0
        %939 = vmatpush1.msra.mxu0 0.0
        %940 = vmatprep.subr.mxu0 0.0
        %941 = vmatpush1.msra.mxu0 0.0
        %942 = vmatprep.subr.mxu0 0.0
        %943 = vmatpush1.msra.mxu0 0.0
        %944 = vmatprep.subr.mxu0 0.0
        %945 = vmatpush1.msra.mxu0 0.0
        %946 = vmatprep.subr.mxu0 0.0
        %947 = vmatpush1.msra.mxu0 0.0
        %948 = vmatprep.subr.mxu0 %v457
        %949 = vmatpush1.msra.mxu0 %v456
        %950 = vmatprep.subr.mxu0 %v455
        %951 = vmatpush1.msra.mxu0 %v454
        %952 = vmatprep.subr.mxu0 %v453
        %953 = vmatpush1.msra.mxu0 %v452
        %954 = vmatprep.subr.mxu0 %v451
        %955 = vmatpush1.msra.mxu0 %v450
        %956 = vmatprep.subr.mxu0 0.0
        %957 = vmatpush2.msra.mxu0 0.0
        %958 = vmatprep.subr.mxu0 0.0
        %959 = vmatpush2.msra.mxu0 0.0
        %960 = vmatprep.subr.mxu0 0.0
        %961 = vmatpush2.msra.mxu0 0.0
        %962 = vmatprep.subr.mxu0 0.0
        %963 = vmatpush2.msra.mxu0 0.0
        %964 = vmatprep.subr.mxu0 0.0
        %965 = vmatpush2.msra.mxu0 0.0
        %966 = vmatprep.subr.mxu0 0.0
        %967 = vmatpush2.msra.mxu0 0.0
        %968 = vmatprep.subr.mxu0 0.0
        %969 = vmatpush2.msra.mxu0 0.0
        %970 = vmatprep.subr.mxu0 0.0
        %971 = vmatpush2.msra.mxu0 0.0
        %972 = vmatprep.subr.mxu0 0.0
        %973 = vmatpush2.msra.mxu0 0.0
        %974 = vmatprep.subr.mxu0 0.0
        %975 = vmatpush2.msra.mxu0 0.0
        %976 = vmatprep.subr.mxu0 0.0
        %977 = vmatpush2.msra.mxu0 0.0
        %978 = vmatprep.subr.mxu0 0.0
        %979 = vmatpush2.msra.mxu0 0.0
        %980 = vmatprep.subr.mxu0 0.0
        %981 = vmatpush2.msra.mxu0 0.0
        %982 = vmatprep.subr.mxu0 0.0
        %983 = vmatpush2.msra.mxu0 0.0
        %984 = vmatprep.subr.mxu0 0.0
        %985 = vmatpush2.msra.mxu0 0.0
        %986 = vmatprep.subr.mxu0 0.0
        %987 = vmatpush2.msra.mxu0 0.0
        %988 = vmatprep.mubr.f32.mxu0 0.0
        %989 = vmatmul.mubr.f32.gmra.mxu0 %v922
        %v990 = vpop.f32.mrf.mxu0
        %v991 = vadd.f32 %v919, %v990
        %v992 = vpop.f32.mrf.mxu0
        %v993 = vadd.f32 %v920, %v992
        %994 = vdwg.mxu0
        %s995 = scalar_lea.vmem [#allocation8], 8
        %v996 = vld [vmem:[%s995] sm:$0xf]
        %v998 = vsel %vm516, %v996, 0
        %1000 = vmatprep.subr.mxu0 0.0
        %1001 = vmatpush1.msra.mxu0 0.0
        %1002 = vmatprep.subr.mxu0 0.0
        %1003 = vmatpush1.msra.mxu0 0.0
        %1004 = vmatprep.subr.mxu0 0.0
        %1005 = vmatpush1.msra.mxu0 0.0
        %1006 = vmatprep.subr.mxu0 0.0
        %1007 = vmatpush1.msra.mxu0 0.0
        %1008 = vmatprep.subr.mxu0 0.0
        %1009 = vmatpush1.msra.mxu0 0.0
        %1010 = vmatprep.subr.mxu0 0.0
        %1011 = vmatpush1.msra.mxu0 0.0
        %1012 = vmatprep.subr.mxu0 0.0
        %1013 = vmatpush1.msra.mxu0 0.0
        %1014 = vmatprep.subr.mxu0 0.0
        %1015 = vmatpush1.msra.mxu0 0.0
        %1016 = vmatprep.subr.mxu0 0.0
        %1017 = vmatpush1.msra.mxu0 0.0
        %1018 = vmatprep.subr.mxu0 0.0
        %1019 = vmatpush1.msra.mxu0 0.0
        %1020 = vmatprep.subr.mxu0 0.0
        %1021 = vmatpush1.msra.mxu0 0.0
        %1022 = vmatprep.subr.mxu0 0.0
        %1023 = vmatpush1.msra.mxu0 0.0
        %1024 = vmatprep.subr.mxu0 %v830
        %1025 = vmatpush1.msra.mxu0 %v826
        %1026 = vmatprep.subr.mxu0 %v829
        %1027 = vmatpush1.msra.mxu0 %v825
        %1028 = vmatprep.subr.mxu0 %v828
        %1029 = vmatpush1.msra.mxu0 %v824
        %1030 = vmatprep.subr.mxu0 %v827
        %1031 = vmatpush1.msra.mxu0 %v823
        %1032 = vmatprep.subr.mxu0 0.0
        %1033 = vmatpush2.msra.mxu0 0.0
        %1034 = vmatprep.subr.mxu0 0.0
        %1035 = vmatpush2.msra.mxu0 0.0
        %1036 = vmatprep.subr.mxu0 0.0
        %1037 = vmatpush2.msra.mxu0 0.0
        %1038 = vmatprep.subr.mxu0 0.0
        %1039 = vmatpush2.msra.mxu0 0.0
        %1040 = vmatprep.subr.mxu0 0.0
        %1041 = vmatpush2.msra.mxu0 0.0
        %1042 = vmatprep.subr.mxu0 0.0
        %1043 = vmatpush2.msra.mxu0 0.0
        %1044 = vmatprep.subr.mxu0 0.0
        %1045 = vmatpush2.msra.mxu0 0.0
        %1046 = vmatprep.subr.mxu0 0.0
        %1047 = vmatpush2.msra.mxu0 0.0
        %1048 = vmatprep.subr.mxu0 0.0
        %1049 = vmatpush2.msra.mxu0 0.0
        %1050 = vmatprep.subr.mxu0 0.0
        %1051 = vmatpush2.msra.mxu0 0.0
        %1052 = vmatprep.subr.mxu0 0.0
        %1053 = vmatpush2.msra.mxu0 0.0
        %1054 = vmatprep.subr.mxu0 0.0
        %1055 = vmatpush2.msra.mxu0 0.0
        %1056 = vmatprep.subr.mxu0 0.0
        %1057 = vmatpush2.msra.mxu0 0.0
        %1058 = vmatprep.subr.mxu0 0.0
        %1059 = vmatpush2.msra.mxu0 0.0
        %1060 = vmatprep.subr.mxu0 0.0
        %1061 = vmatpush2.msra.mxu0 0.0
        %1062 = vmatprep.subr.mxu0 0.0
        %1063 = vmatpush2.msra.mxu0 0.0
        %1064 = vmatprep.mubr.f32.mxu0 0.0
        %1065 = vmatmul.mubr.f32.gmra.mxu0 %v998
        %v1066 = vpop.f32.mrf.mxu0
        %v1067 = vadd.f32 0.0, %v1066
        %v1068 = vpop.f32.mrf.mxu0
        %v1069 = vadd.f32 0.0, %v1068
        %1070 = vdwg.mxu0
        %v1072 = vlaneseq
        %v1073 = vshrl.u32 %v1072, 7
        %v1074 = vsub.s32 0, %v1073
        %v1075 = vrot.slane %v780, %v1074
        %v1076 = vlaneseq
        %v1077 = vshrl.u32 %v1076, 7
        %v1078 = vsub.s32 1, %v1077
        %v1079 = vrot.slane %v780, %v1078
        %v1082 = vmul.f32 %v1075, %v1067
        %v1083 = vmul.f32 %v1079, %v1069
        %v1084 = vadd.f32 %v991, %v1082
        %v1085 = vadd.f32 %v993, %v1083
        %v1086 = vld [vmem:[%s7] sm:$0xf]
        %1088 = vset.pattern.permute.xlu0 0
        %1089 = vperm.xlu0 %1088, %v1086
        %v1090 = vpop.permute.xlu0 %1089
        %v1092 = vadd.f32 %v1084, %v1090
        %v1093 = vadd.f32 %v1085, %v1090
        %s1094 = scalar_lea.vmem %s1, 4
        %v1095 = vld [vmem:[%s1094] ss:$8 sm:$0x3]
        %s1096 = scalar_lea.vmem %s1, 5
        %v1097 = vld [vmem:[%s1096] ss:$8 sm:$0x3]
        %1098 = vrot.lane.b32.xlu0 %v450, 1
        %v1099 = vpop.permute.xlu0 %1098
        %1100 = vrot.lane.b32.xlu0 %v452, 1
        %v1101 = vpop.permute.xlu0 %1100
        %1102 = vrot.lane.b32.xlu0 %v454, 1
        %v1103 = vpop.permute.xlu0 %1102
        %1104 = vrot.lane.b32.xlu0 %v456, 1
        %v1105 = vpop.permute.xlu0 %1104
        %1106 = vrot.lane.b32.xlu0 %v451, 1
        %v1107 = vpop.permute.xlu0 %1106
        %1108 = vrot.lane.b32.xlu0 %v453, 1
        %v1109 = vpop.permute.xlu0 %1108
        %1110 = vrot.lane.b32.xlu0 %v455, 1
        %v1111 = vpop.permute.xlu0 %1110
        %1112 = vrot.lane.b32.xlu0 %v457, 1
        %v1113 = vpop.permute.xlu0 %1112
        %vm1114 = vcmp.lt.s32.totalorder %v478, 1
        %v1115 = vsel %vm1114, %v1099, %v1107
        %v1116 = vsel %vm1114, %v1101, %v1109
        %v1117 = vsel %vm1114, %v1103, %v1111
        %v1118 = vsel %vm1114, %v1105, %v1113
        %v1119 = vsel %vm1114, %v1107, %v1099
        %v1120 = vsel %vm1114, %v1109, %v1101
        %v1121 = vsel %vm1114, %v1111, %v1103
        %v1122 = vsel %vm1114, %v1113, %v1105
        %1123 = vrot.lane.b32.xlu0 %v450, 127
        %v1124 = vpop.permute.xlu0 %1123
        %1125 = vrot.lane.b32.xlu0 %v452, 127
        %v1126 = vpop.permute.xlu0 %1125
        %1127 = vrot.lane.b32.xlu0 %v454, 127
        %v1128 = vpop.permute.xlu0 %1127
        %1129 = vrot.lane.b32.xlu0 %v456, 127
        %v1130 = vpop.permute.xlu0 %1129
        %1131 = vrot.lane.b32.xlu0 %v451, 127
        %v1132 = vpop.permute.xlu0 %1131
        %1133 = vrot.lane.b32.xlu0 %v453, 127
        %v1134 = vpop.permute.xlu0 %1133
        %1135 = vrot.lane.b32.xlu0 %v455, 127
        %v1136 = vpop.permute.xlu0 %1135
        %1137 = vrot.lane.b32.xlu0 %v457, 127
        %v1138 = vpop.permute.xlu0 %1137
        %vm1139 = vcmp.lt.s32.totalorder %v478, 127
        %v1140 = vsel %vm1139, %v1124, %v1132
        %v1141 = vsel %vm1139, %v1126, %v1134
        %v1142 = vsel %vm1139, %v1128, %v1136
        %v1143 = vsel %vm1139, %v1130, %v1138
        %v1144 = vsel %vm1139, %v1132, %v1124
        %v1145 = vsel %vm1139, %v1134, %v1126
        %v1146 = vsel %vm1139, %v1136, %v1128
        %v1147 = vsel %vm1139, %v1138, %v1130
        %s1148 = scalar_lea.vmem [#allocation9], 4
        %v1149 = vld [vmem:[%s1148] sm:$0xf]
        %v1150 = vld [vmem:[#allocation9] sm:$0xf]
        %v1152 = vsel %vm516, %v1150, 0
        %1154 = vmatprep.subr.mxu0 0.0
        %1155 = vmatpush1.msra.mxu0 0.0
        %1156 = vmatprep.subr.mxu0 0.0
        %1157 = vmatpush1.msra.mxu0 0.0
        %1158 = vmatprep.subr.mxu0 0.0
        %1159 = vmatpush1.msra.mxu0 0.0
        %1160 = vmatprep.subr.mxu0 0.0
        %1161 = vmatpush1.msra.mxu0 0.0
        %1162 = vmatprep.subr.mxu0 0.0
        %1163 = vmatpush1.msra.mxu0 0.0
        %1164 = vmatprep.subr.mxu0 0.0
        %1165 = vmatpush1.msra.mxu0 0.0
        %1166 = vmatprep.subr.mxu0 0.0
        %1167 = vmatpush1.msra.mxu0 0.0
        %1168 = vmatprep.subr.mxu0 0.0
        %1169 = vmatpush1.msra.mxu0 0.0
        %1170 = vmatprep.subr.mxu0 0.0
        %1171 = vmatpush1.msra.mxu0 0.0
        %1172 = vmatprep.subr.mxu0 0.0
        %1173 = vmatpush1.msra.mxu0 0.0
        %1174 = vmatprep.subr.mxu0 0.0
        %1175 = vmatpush1.msra.mxu0 0.0
        %1176 = vmatprep.subr.mxu0 0.0
        %1177 = vmatpush1.msra.mxu0 0.0
        %1178 = vmatprep.subr.mxu0 %v1118
        %1179 = vmatpush1.msra.mxu0 %v1122
        %1180 = vmatprep.subr.mxu0 %v1117
        %1181 = vmatpush1.msra.mxu0 %v1121
        %1182 = vmatprep.subr.mxu0 %v1116
        %1183 = vmatpush1.msra.mxu0 %v1120
        %1184 = vmatprep.subr.mxu0 %v1115
        %1185 = vmatpush1.msra.mxu0 %v1119
        %1186 = vmatprep.subr.mxu0 0.0
        %1187 = vmatpush2.msra.mxu0 0.0
        %1188 = vmatprep.subr.mxu0 0.0
        %1189 = vmatpush2.msra.mxu0 0.0
        %1190 = vmatprep.subr.mxu0 0.0
        %1191 = vmatpush2.msra.mxu0 0.0
        %1192 = vmatprep.subr.mxu0 0.0
        %1193 = vmatpush2.msra.mxu0 0.0
        %1194 = vmatprep.subr.mxu0 0.0
        %1195 = vmatpush2.msra.mxu0 0.0
        %1196 = vmatprep.subr.mxu0 0.0
        %1197 = vmatpush2.msra.mxu0 0.0
        %1198 = vmatprep.subr.mxu0 0.0
        %1199 = vmatpush2.msra.mxu0 0.0
        %1200 = vmatprep.subr.mxu0 0.0
        %1201 = vmatpush2.msra.mxu0 0.0
        %1202 = vmatprep.subr.mxu0 0.0
        %1203 = vmatpush2.msra.mxu0 0.0
        %1204 = vmatprep.subr.mxu0 0.0
        %1205 = vmatpush2.msra.mxu0 0.0
        %1206 = vmatprep.subr.mxu0 0.0
        %1207 = vmatpush2.msra.mxu0 0.0
        %1208 = vmatprep.subr.mxu0 0.0
        %1209 = vmatpush2.msra.mxu0 0.0
        %1210 = vmatprep.subr.mxu0 0.0
        %1211 = vmatpush2.msra.mxu0 0.0
        %1212 = vmatprep.subr.mxu0 0.0
        %1213 = vmatpush2.msra.mxu0 0.0
        %1214 = vmatprep.subr.mxu0 0.0
        %1215 = vmatpush2.msra.mxu0 0.0
        %1216 = vmatprep.subr.mxu0 0.0
        %1217 = vmatpush2.msra.mxu0 0.0
        %1218 = vmatprep.mubr.f32.mxu0 0.0
        %1219 = vmatmul.mubr.f32.gmra.mxu0 %v1152
        %v1220 = vpop.f32.mrf.mxu0
        %v1221 = vadd.f32 0.0, %v1220
        %v1222 = vpop.f32.mrf.mxu0
        %v1223 = vadd.f32 0.0, %v1222
        %1224 = vdwg.mxu0
        %v1226 = vlaneseq
        %v1227 = vshrl.u32 %v1226, 7
        %v1228 = vsub.s32 0, %v1227
        %v1229 = vrot.slane %v1095, %v1228
        %v1230 = vlaneseq
        %v1231 = vshrl.u32 %v1230, 7
        %v1232 = vsub.s32 1, %v1231
        %v1233 = vrot.slane %v1095, %v1232
        %v1236 = vmul.f32 %v1229, %v1221
        %v1237 = vmul.f32 %v1233, %v1223
        %v1239 = vsel %vm516, %v1149, 0
        %1241 = vmatprep.subr.mxu0 0.0
        %1242 = vmatpush1.msra.mxu0 0.0
        %1243 = vmatprep.subr.mxu0 0.0
        %1244 = vmatpush1.msra.mxu0 0.0
        %1245 = vmatprep.subr.mxu0 0.0
        %1246 = vmatpush1.msra.mxu0 0.0
        %1247 = vmatprep.subr.mxu0 0.0
        %1248 = vmatpush1.msra.mxu0 0.0
        %1249 = vmatprep.subr.mxu0 0.0
        %1250 = vmatpush1.msra.mxu0 0.0
        %1251 = vmatprep.subr.mxu0 0.0
        %1252 = vmatpush1.msra.mxu0 0.0
        %1253 = vmatprep.subr.mxu0 0.0
        %1254 = vmatpush1.msra.mxu0 0.0
        %1255 = vmatprep.subr.mxu0 0.0
        %1256 = vmatpush1.msra.mxu0 0.0
        %1257 = vmatprep.subr.mxu0 0.0
        %1258 = vmatpush1.msra.mxu0 0.0
        %1259 = vmatprep.subr.mxu0 0.0
        %1260 = vmatpush1.msra.mxu0 0.0
        %1261 = vmatprep.subr.mxu0 0.0
        %1262 = vmatpush1.msra.mxu0 0.0
        %1263 = vmatprep.subr.mxu0 0.0
        %1264 = vmatpush1.msra.mxu0 0.0
        %1265 = vmatprep.subr.mxu0 %v457
        %1266 = vmatpush1.msra.mxu0 %v456
        %1267 = vmatprep.subr.mxu0 %v455
        %1268 = vmatpush1.msra.mxu0 %v454
        %1269 = vmatprep.subr.mxu0 %v453
        %1270 = vmatpush1.msra.mxu0 %v452
        %1271 = vmatprep.subr.mxu0 %v451
        %1272 = vmatpush1.msra.mxu0 %v450
        %1273 = vmatprep.subr.mxu0 0.0
        %1274 = vmatpush2.msra.mxu0 0.0
        %1275 = vmatprep.subr.mxu0 0.0
        %1276 = vmatpush2.msra.mxu0 0.0
        %1277 = vmatprep.subr.mxu0 0.0
        %1278 = vmatpush2.msra.mxu0 0.0
        %1279 = vmatprep.subr.mxu0 0.0
        %1280 = vmatpush2.msra.mxu0 0.0
        %1281 = vmatprep.subr.mxu0 0.0
        %1282 = vmatpush2.msra.mxu0 0.0
        %1283 = vmatprep.subr.mxu0 0.0
        %1284 = vmatpush2.msra.mxu0 0.0
        %1285 = vmatprep.subr.mxu0 0.0
        %1286 = vmatpush2.msra.mxu0 0.0
        %1287 = vmatprep.subr.mxu0 0.0
        %1288 = vmatpush2.msra.mxu0 0.0
        %1289 = vmatprep.subr.mxu0 0.0
        %1290 = vmatpush2.msra.mxu0 0.0
        %1291 = vmatprep.subr.mxu0 0.0
        %1292 = vmatpush2.msra.mxu0 0.0
        %1293 = vmatprep.subr.mxu0 0.0
        %1294 = vmatpush2.msra.mxu0 0.0
        %1295 = vmatprep.subr.mxu0 0.0
        %1296 = vmatpush2.msra.mxu0 0.0
        %1297 = vmatprep.subr.mxu0 0.0
        %1298 = vmatpush2.msra.mxu0 0.0
        %1299 = vmatprep.subr.mxu0 0.0
        %1300 = vmatpush2.msra.mxu0 0.0
        %1301 = vmatprep.subr.mxu0 0.0
        %1302 = vmatpush2.msra.mxu0 0.0
        %1303 = vmatprep.subr.mxu0 0.0
        %1304 = vmatpush2.msra.mxu0 0.0
        %1305 = vmatprep.mubr.f32.mxu0 0.0
        %1306 = vmatmul.mubr.f32.gmra.mxu0 %v1239
        %v1307 = vpop.f32.mrf.mxu0
        %v1308 = vadd.f32 %v1236, %v1307
        %v1309 = vpop.f32.mrf.mxu0
        %v1310 = vadd.f32 %v1237, %v1309
        %1311 = vdwg.mxu0
        %s1312 = scalar_lea.vmem [#allocation9], 8
        %v1313 = vld [vmem:[%s1312] sm:$0xf]
        %v1315 = vsel %vm516, %v1313, 0
        %1317 = vmatprep.subr.mxu0 0.0
        %1318 = vmatpush1.msra.mxu0 0.0
        %1319 = vmatprep.subr.mxu0 0.0
        %1320 = vmatpush1.msra.mxu0 0.0
        %1321 = vmatprep.subr.mxu0 0.0
        %1322 = vmatpush1.msra.mxu0 0.0
        %1323 = vmatprep.subr.mxu0 0.0
        %1324 = vmatpush1.msra.mxu0 0.0
        %1325 = vmatprep.subr.mxu0 0.0
        %1326 = vmatpush1.msra.mxu0 0.0
        %1327 = vmatprep.subr.mxu0 0.0
        %1328 = vmatpush1.msra.mxu0 0.0
        %1329 = vmatprep.subr.mxu0 0.0
        %1330 = vmatpush1.msra.mxu0 0.0
        %1331 = vmatprep.subr.mxu0 0.0
        %1332 = vmatpush1.msra.mxu0 0.0
        %1333 = vmatprep.subr.mxu0 0.0
        %1334 = vmatpush1.msra.mxu0 0.0
        %1335 = vmatprep.subr.mxu0 0.0
        %1336 = vmatpush1.msra.mxu0 0.0
        %1337 = vmatprep.subr.mxu0 0.0
        %1338 = vmatpush1.msra.mxu0 0.0
        %1339 = vmatprep.subr.mxu0 0.0
        %1340 = vmatpush1.msra.mxu0 0.0
        %1341 = vmatprep.subr.mxu0 %v1147
        %1342 = vmatpush1.msra.mxu0 %v1143
        %1343 = vmatprep.subr.mxu0 %v1146
        %1344 = vmatpush1.msra.mxu0 %v1142
        %1345 = vmatprep.subr.mxu0 %v1145
        %1346 = vmatpush1.msra.mxu0 %v1141
        %1347 = vmatprep.subr.mxu0 %v1144
        %1348 = vmatpush1.msra.mxu0 %v1140
        %1349 = vmatprep.subr.mxu0 0.0
        %1350 = vmatpush2.msra.mxu0 0.0
        %1351 = vmatprep.subr.mxu0 0.0
        %1352 = vmatpush2.msra.mxu0 0.0
        %1353 = vmatprep.subr.mxu0 0.0
        %1354 = vmatpush2.msra.mxu0 0.0
        %1355 = vmatprep.subr.mxu0 0.0
        %1356 = vmatpush2.msra.mxu0 0.0
        %1357 = vmatprep.subr.mxu0 0.0
        %1358 = vmatpush2.msra.mxu0 0.0
        %1359 = vmatprep.subr.mxu0 0.0
        %1360 = vmatpush2.msra.mxu0 0.0
        %1361 = vmatprep.subr.mxu0 0.0
        %1362 = vmatpush2.msra.mxu0 0.0
        %1363 = vmatprep.subr.mxu0 0.0
        %1364 = vmatpush2.msra.mxu0 0.0
        %1365 = vmatprep.subr.mxu0 0.0
        %1366 = vmatpush2.msra.mxu0 0.0
        %1367 = vmatprep.subr.mxu0 0.0
        %1368 = vmatpush2.msra.mxu0 0.0
        %1369 = vmatprep.subr.mxu0 0.0
        %1370 = vmatpush2.msra.mxu0 0.0
        %1371 = vmatprep.subr.mxu0 0.0
        %1372 = vmatpush2.msra.mxu0 0.0
        %1373 = vmatprep.subr.mxu0 0.0
        %1374 = vmatpush2.msra.mxu0 0.0
        %1375 = vmatprep.subr.mxu0 0.0
        %1376 = vmatpush2.msra.mxu0 0.0
        %1377 = vmatprep.subr.mxu0 0.0
        %1378 = vmatpush2.msra.mxu0 0.0
        %1379 = vmatprep.subr.mxu0 0.0
        %1380 = vmatpush2.msra.mxu0 0.0
        %1381 = vmatprep.mubr.f32.mxu0 0.0
        %1382 = vmatmul.mubr.f32.gmra.mxu0 %v1315
        %v1383 = vpop.f32.mrf.mxu0
        %v1384 = vadd.f32 0.0, %v1383
        %v1385 = vpop.f32.mrf.mxu0
        %v1386 = vadd.f32 0.0, %v1385
        %1387 = vdwg.mxu0
        %v1389 = vlaneseq
        %v1390 = vshrl.u32 %v1389, 7
        %v1391 = vsub.s32 0, %v1390
        %v1392 = vrot.slane %v1097, %v1391
        %v1393 = vlaneseq
        %v1394 = vshrl.u32 %v1393, 7
        %v1395 = vsub.s32 1, %v1394
        %v1396 = vrot.slane %v1097, %v1395
        %v1399 = vmul.f32 %v1392, %v1384
        %v1400 = vmul.f32 %v1396, %v1386
        %v1401 = vadd.f32 %v1308, %v1399
        %v1402 = vadd.f32 %v1310, %v1400
        %v1403 = vld [vmem:[%s8] sm:$0xf]
        %1405 = vset.pattern.permute.xlu0 0
        %1406 = vperm.xlu0 %1405, %v1403
        %v1407 = vpop.permute.xlu0 %1406
        %v1409 = vadd.f32 %v1401, %v1407
        %v1410 = vadd.f32 %v1402, %v1407
        %v1411 = vld [vmem:[%s5] sm:$0xff]
        %v1412 = vld [vmem:[%s5 + $0x8] sm:$0xff]
        %v1413 = vld [vmem:[%s5 + $0x10] sm:$0xff]
        %v1414 = vld [vmem:[%s5 + $0x18] sm:$0xff]
        %v1415 = vld [vmem:[%s9] sm:$0xff]
        %v1416 = vld [vmem:[%s9 + $0x8] sm:$0xff]
        %v1417 = vld [vmem:[%s9 + $0x10] sm:$0xff]
        %v1418 = vld [vmem:[%s9 + $0x18] sm:$0xff]
        %1420 = vset.pattern.permute.xlu0 0
        %1421 = vperm.xlu0 %1420, %v1415
        %v1422 = vpop.permute.xlu0 %1421
        %1425 = vset.pattern.permute.xlu0 0
        %1426 = vperm.xlu0 %1425, %v1416
        %v1427 = vpop.permute.xlu0 %1426
        %1430 = vset.pattern.permute.xlu0 0
        %1431 = vperm.xlu0 %1430, %v1417
        %v1432 = vpop.permute.xlu0 %1431
        %1435 = vset.pattern.permute.xlu0 0
        %1436 = vperm.xlu0 %1435, %v1418
        %v1437 = vpop.permute.xlu0 %1436
        %v1440 = vsel %vm516, %v1411, 0
        %v1443 = vsel %vm516, %v1412, 0
        %v1446 = vsel %vm516, %v1413, 0
        %v1449 = vsel %vm516, %v1414, 0
        %1451 = vmatprep.subr.mxu0 0.0
        %1452 = vmatpush1.msra.mxu0 0.0
        %1453 = vmatprep.subr.mxu0 0.0
        %1454 = vmatpush1.msra.mxu0 0.0
        %1455 = vmatprep.subr.mxu0 0.0
        %1456 = vmatpush1.msra.mxu0 0.0
        %1457 = vmatprep.subr.mxu0 0.0
        %1458 = vmatpush1.msra.mxu0 0.0
        %1459 = vmatprep.subr.mxu0 0.0
        %1460 = vmatpush1.msra.mxu0 0.0
        %1461 = vmatprep.subr.mxu0 0.0
        %1462 = vmatpush1.msra.mxu0 0.0
        %1463 = vmatprep.subr.mxu0 0.0
        %1464 = vmatpush1.msra.mxu0 0.0
        %1465 = vmatprep.subr.mxu0 0.0
        %1466 = vmatpush1.msra.mxu0 0.0
        %1467 = vmatprep.subr.mxu0 0.0
        %1468 = vmatpush1.msra.mxu0 0.0
        %1469 = vmatprep.subr.mxu0 0.0
        %1470 = vmatpush1.msra.mxu0 0.0
        %1471 = vmatprep.subr.mxu0 0.0
        %1472 = vmatpush1.msra.mxu0 0.0
        %1473 = vmatprep.subr.mxu0 0.0
        %1474 = vmatpush1.msra.mxu0 0.0
        %1475 = vmatprep.subr.mxu0 %v457
        %1476 = vmatpush1.msra.mxu0 %v456
        %1477 = vmatprep.subr.mxu0 %v455
        %1478 = vmatpush1.msra.mxu0 %v454
        %1479 = vmatprep.subr.mxu0 %v453
        %1480 = vmatpush1.msra.mxu0 %v452
        %1481 = vmatprep.subr.mxu0 %v451
        %1482 = vmatpush1.msra.mxu0 %v450
        %1483 = vmatprep.subr.mxu0 0.0
        %1484 = vmatpush2.msra.mxu0 0.0
        %1485 = vmatprep.subr.mxu0 0.0
        %1486 = vmatpush2.msra.mxu0 0.0
        %1487 = vmatprep.subr.mxu0 0.0
        %1488 = vmatpush2.msra.mxu0 0.0
        %1489 = vmatprep.subr.mxu0 0.0
        %1490 = vmatpush2.msra.mxu0 0.0
        %1491 = vmatprep.subr.mxu0 0.0
        %1492 = vmatpush2.msra.mxu0 0.0
        %1493 = vmatprep.subr.mxu0 0.0
        %1494 = vmatpush2.msra.mxu0 0.0
        %1495 = vmatprep.subr.mxu0 0.0
        %1496 = vmatpush2.msra.mxu0 0.0
        %1497 = vmatprep.subr.mxu0 0.0
        %1498 = vmatpush2.msra.mxu0 0.0
        %1499 = vmatprep.subr.mxu0 0.0
        %1500 = vmatpush2.msra.mxu0 0.0
        %1501 = vmatprep.subr.mxu0 0.0
        %1502 = vmatpush2.msra.mxu0 0.0
        %1503 = vmatprep.subr.mxu0 0.0
        %1504 = vmatpush2.msra.mxu0 0.0
        %1505 = vmatprep.subr.mxu0 0.0
        %1506 = vmatpush2.msra.mxu0 0.0
        %1507 = vmatprep.subr.mxu0 0.0
        %1508 = vmatpush2.msra.mxu0 0.0
        %1509 = vmatprep.subr.mxu0 0.0
        %1510 = vmatpush2.msra.mxu0 0.0
        %1511 = vmatprep.subr.mxu0 0.0
        %1512 = vmatpush2.msra.mxu0 0.0
        %1513 = vmatprep.subr.mxu0 0.0
        %1514 = vmatpush2.msra.mxu0 0.0
        %1515 = vmatprep.mubr.f32.mxu0 0.0
        %1516 = vmatmul.mubr.f32.gmra.mxu0 %v1440
        %v1517 = vpop.f32.mrf.mxu0
        %v1518 = vadd.f32 %v1422, %v1517
        %v1519 = vpop.f32.mrf.mxu0
        %v1520 = vadd.f32 %v1422, %v1519
        %1521 = vmatprep.mubr.f32.mxu0 0.0
        %1522 = vmatmul.mubr.f32.gmra.mxu0 %v1443
        %v1523 = vpop.f32.mrf.mxu0
        %v1524 = vadd.f32 %v1427, %v1523
        %v1525 = vpop.f32.mrf.mxu0
        %v1526 = vadd.f32 %v1427, %v1525
        %1527 = vmatprep.mubr.f32.mxu0 0.0
        %1528 = vmatmul.mubr.f32.gmra.mxu0 %v1446
        %v1529 = vpop.f32.mrf.mxu0
        %v1530 = vadd.f32 %v1432, %v1529
        %v1531 = vpop.f32.mrf.mxu0
        %v1532 = vadd.f32 %v1432, %v1531
        %1533 = vmatprep.mubr.f32.mxu0 0.0
        %1534 = vmatmul.mubr.f32.gmra.mxu0 %v1449
        %v1535 = vpop.f32.mrf.mxu0
        %v1536 = vadd.f32 %v1437, %v1535
        %v1537 = vpop.f32.mrf.mxu0
        %v1538 = vadd.f32 %v1437, %v1537
        %1539 = vdwg.mxu0
        %1540 = vmatprep.subr.mxu0 0.0
        %1541 = vmatpush1.xpose.msra.mxu0 0.0
        %1542 = vmatprep.subr.mxu0 0.0
        %1543 = vmatpush1.xpose.msra.mxu0 0.0
        %1544 = vmatprep.subr.mxu0 0.0
        %1545 = vmatpush1.xpose.msra.mxu0 0.0
        %1546 = vmatprep.subr.mxu0 0.0
        %1547 = vmatpush1.xpose.msra.mxu0 0.0
        %1548 = vmatprep.subr.mxu0 0.0
        %1549 = vmatpush1.xpose.msra.mxu0 0.0
        %1550 = vmatprep.subr.mxu0 0.0
        %1551 = vmatpush1.xpose.msra.mxu0 0.0
        %1552 = vmatprep.subr.mxu0 0.0
        %1553 = vmatpush1.xpose.msra.mxu0 0.0
        %1554 = vmatprep.subr.mxu0 0.0
        %1555 = vmatpush1.xpose.msra.mxu0 0.0
        %1556 = vmatprep.subr.mxu0 0.0
        %1557 = vmatpush1.xpose.msra.mxu0 0.0
        %1558 = vmatprep.subr.mxu0 0.0
        %1559 = vmatpush1.xpose.msra.mxu0 0.0
        %1560 = vmatprep.subr.mxu0 0.0
        %1561 = vmatpush1.xpose.msra.mxu0 0.0
        %1562 = vmatprep.subr.mxu0 0.0
        %1563 = vmatpush1.xpose.msra.mxu0 0.0
        %1564 = vmatprep.subr.mxu0 0.0
        %1565 = vmatpush1.xpose.msra.mxu0 0.0
        %1566 = vmatprep.subr.mxu0 0.0
        %1567 = vmatpush1.xpose.msra.mxu0 0.0
        %1568 = vmatprep.subr.mxu0 0.0
        %1569 = vmatpush1.xpose.msra.mxu0 0.0
        %1570 = vmatprep.subr.mxu0 %v1410
        %1571 = vmatpush1.xpose.msra.mxu0 %v1409
        %1572 = vmatprep.subr.mxu0 0.0
        %1573 = vmatpush2.xpose.msra.mxu0 0.0
        %1574 = vmatprep.subr.mxu0 0.0
        %1575 = vmatpush2.xpose.msra.mxu0 0.0
        %1576 = vmatprep.subr.mxu0 0.0
        %1577 = vmatpush2.xpose.msra.mxu0 0.0
        %1578 = vmatprep.subr.mxu0 0.0
        %1579 = vmatpush2.xpose.msra.mxu0 0.0
        %1580 = vmatprep.subr.mxu0 0.0
        %1581 = vmatpush2.xpose.msra.mxu0 0.0
        %1582 = vmatprep.subr.mxu0 0.0
        %1583 = vmatpush2.xpose.msra.mxu0 0.0
        %1584 = vmatprep.subr.mxu0 0.0
        %1585 = vmatpush2.xpose.msra.mxu0 0.0
        %1586 = vmatprep.subr.mxu0 0.0
        %1587 = vmatpush2.xpose.msra.mxu0 0.0
        %1588 = vmatprep.subr.mxu0 0.0
        %1589 = vmatpush2.xpose.msra.mxu0 0.0
        %1590 = vmatprep.subr.mxu0 0.0
        %1591 = vmatpush2.xpose.msra.mxu0 0.0
        %1592 = vmatprep.subr.mxu0 0.0
        %1593 = vmatpush2.xpose.msra.mxu0 0.0
        %1594 = vmatprep.subr.mxu0 0.0
        %1595 = vmatpush2.xpose.msra.mxu0 0.0
        %1596 = vmatprep.subr.mxu0 0.0
        %1597 = vmatpush2.xpose.msra.mxu0 0.0
        %1598 = vmatprep.subr.mxu0 0.0
        %1599 = vmatpush2.xpose.msra.mxu0 0.0
        %1600 = vmatprep.subr.mxu0 0.0
        %1601 = vmatpush2.xpose.msra.mxu0 0.0
        %1602 = vmatprep.subr.mxu0 0.0
        %1603 = vmatpush2.xpose.msra.mxu0 0.0
        %1604 = vmatprep.mubr.f32.mxu0 %v1093
        %1605 = vmatmul.mubr.f32.gmra.mxu0 %v1092
        %v1606 = vpop.f32.mrf.mxu0
        %v1607 = vadd.f32 0.0, %v1606
        %v1608 = vpop.f32.mrf.mxu0
        %1609 = vdwg.mxu0
        %vm1610 = vcmask 31744
        %v1612 = vsel %vm1610, %v1607, 0
        %vm1614 = vcmask 1043456
        %v1616 = vsel %vm1614, %v1092, 0
        %v1619 = vsel %vm1614, %v1093, 0
        %1621 = vmatprep.subr.mxu0 0.0
        %1622 = vmatpush1.msra.mxu0 0.0
        %1623 = vmatprep.subr.mxu0 0.0
        %1624 = vmatpush1.msra.mxu0 0.0
        %1625 = vmatprep.subr.mxu0 0.0
        %1626 = vmatpush1.msra.mxu0 0.0
        %1627 = vmatprep.subr.mxu0 0.0
        %1628 = vmatpush1.msra.mxu0 0.0
        %1629 = vmatprep.subr.mxu0 0.0
        %1630 = vmatpush1.msra.mxu0 0.0
        %1631 = vmatprep.subr.mxu0 0.0
        %1632 = vmatpush1.msra.mxu0 0.0
        %1633 = vmatprep.subr.mxu0 0.0
        %1634 = vmatpush1.msra.mxu0 0.0
        %1635 = vmatprep.subr.mxu0 0.0
        %1636 = vmatpush1.msra.mxu0 0.0
        %1637 = vmatprep.subr.mxu0 0.0
        %1638 = vmatpush1.msra.mxu0 0.0
        %1639 = vmatprep.subr.mxu0 0.0
        %1640 = vmatpush1.msra.mxu0 0.0
        %1641 = vmatprep.subr.mxu0 0.0
        %1642 = vmatpush1.msra.mxu0 0.0
        %1643 = vmatprep.subr.mxu0 0.0
        %1644 = vmatpush1.msra.mxu0 0.0
        %1645 = vmatprep.subr.mxu0 0.0
        %1646 = vmatpush1.msra.mxu0 0.0
        %1647 = vmatprep.subr.mxu0 0.0
        %1648 = vmatpush1.msra.mxu0 0.0
        %1649 = vmatprep.subr.mxu0 0.0
        %1650 = vmatpush1.msra.mxu0 0.0
        %1651 = vmatprep.subr.mxu0 %v1619
        %1652 = vmatpush1.msra.mxu0 %v1616
        %1653 = vmatprep.subr.mxu0 0.0
        %1654 = vmatpush2.msra.mxu0 0.0
        %1655 = vmatprep.subr.mxu0 0.0
        %1656 = vmatpush2.msra.mxu0 0.0
        %1657 = vmatprep.subr.mxu0 0.0
        %1658 = vmatpush2.msra.mxu0 0.0
        %1659 = vmatprep.subr.mxu0 0.0
        %1660 = vmatpush2.msra.mxu0 0.0
        %1661 = vmatprep.subr.mxu0 0.0
        %1662 = vmatpush2.msra.mxu0 0.0
        %1663 = vmatprep.subr.mxu0 0.0
        %1664 = vmatpush2.msra.mxu0 0.0
        %1665 = vmatprep.subr.mxu0 0.0
        %1666 = vmatpush2.msra.mxu0 0.0
        %1667 = vmatprep.subr.mxu0 0.0
        %1668 = vmatpush2.msra.mxu0 0.0
        %1669 = vmatprep.subr.mxu0 0.0
        %1670 = vmatpush2.msra.mxu0 0.0
        %1671 = vmatprep.subr.mxu0 0.0
        %1672 = vmatpush2.msra.mxu0 0.0
        %1673 = vmatprep.subr.mxu0 0.0
        %1674 = vmatpush2.msra.mxu0 0.0
        %1675 = vmatprep.subr.mxu0 0.0
        %1676 = vmatpush2.msra.mxu0 0.0
        %1677 = vmatprep.subr.mxu0 0.0
        %1678 = vmatpush2.msra.mxu0 0.0
        %1679 = vmatprep.subr.mxu0 0.0
        %1680 = vmatpush2.msra.mxu0 0.0
        %1681 = vmatprep.subr.mxu0 0.0
        %1682 = vmatpush2.msra.mxu0 0.0
        %1683 = vmatprep.subr.mxu0 0.0
        %1684 = vmatpush2.msra.mxu0 0.0
        %1685 = vmatprep.mubr.f32.mxu0 0.0
        %1686 = vmatmul.mubr.f32.gmra.mxu0 %v1612
        %v1687 = vpop.f32.mrf.mxu0
        %v1688 = vadd.f32 0.0, %v1687
        %v1689 = vpop.f32.mrf.mxu0
        %v1690 = vadd.f32 0.0, %v1689
        %1691 = vdwg.mxu0
        %1692 = vxpose.xlu0.b32.start [1/16] %v775, 128
        %1693 = vxpose.xlu0.b32.cont [2/16] 0.0, 128
        %1694 = vxpose.xlu0.b32.cont [3/16] 0.0, 128
        %1695 = vxpose.xlu0.b32.cont [4/16] 0.0, 128
        %1696 = vxpose.xlu0.b32.cont [5/16] 0.0, 128
        %1697 = vxpose.xlu0.b32.cont [6/16] 0.0, 128
        %1698 = vxpose.xlu0.b32.cont [7/16] 0.0, 128
        %1699 = vxpose.xlu0.b32.cont [8/16] 0.0, 128
        %1700 = vxpose.xlu0.b32.cont [9/16] 0.0, 128
        %1701 = vxpose.xlu0.b32.cont [10/16] 0.0, 128
        %1702 = vxpose.xlu0.b32.cont [11/16] 0.0, 128
        %1703 = vxpose.xlu0.b32.cont [12/16] 0.0, 128
        %1704 = vxpose.xlu0.b32.cont [13/16] 0.0, 128
        %1705 = vxpose.xlu0.b32.cont [14/16] 0.0, 128
        %1706 = vxpose.xlu0.b32.cont [15/16] 0.0, 128
        %1707 = vxpose.xlu0.b32.end [16/16] 0.0, 128
        %v1708 = vpop.trf.xlu0
        %v1709 = vpop.trf.xlu0
        %v1710 = vpop.trf.xlu0
        %v1711 = vpop.trf.xlu0
        %v1712 = vpop.trf.xlu0
        %v1713 = vpop.trf.xlu0
        %v1714 = vpop.trf.xlu0
        %v1715 = vpop.trf.xlu0
        %v1716 = vpop.trf.xlu0
        %v1717 = vpop.trf.xlu0
        %v1718 = vpop.trf.xlu0
        %v1719 = vpop.trf.xlu0
        %v1720 = vpop.trf.xlu0
        %v1721 = vpop.trf.xlu0
        %v1722 = vpop.trf.xlu0
        %v1723 = vpop.trf.xlu0
        %1724 = vxpose.xlu0.b32.start [1/16] %v776, 128
        %1725 = vxpose.xlu0.b32.cont [2/16] 0.0, 128
        %1726 = vxpose.xlu0.b32.cont [3/16] 0.0, 128
        %1727 = vxpose.xlu0.b32.cont [4/16] 0.0, 128
        %1728 = vxpose.xlu0.b32.cont [5/16] 0.0, 128
        %1729 = vxpose.xlu0.b32.cont [6/16] 0.0, 128
        %1730 = vxpose.xlu0.b32.cont [7/16] 0.0, 128
        %1731 = vxpose.xlu0.b32.cont [8/16] 0.0, 128
        %1732 = vxpose.xlu0.b32.cont [9/16] 0.0, 128
        %1733 = vxpose.xlu0.b32.cont [10/16] 0.0, 128
        %1734 = vxpose.xlu0.b32.cont [11/16] 0.0, 128
        %1735 = vxpose.xlu0.b32.cont [12/16] 0.0, 128
        %1736 = vxpose.xlu0.b32.cont [13/16] 0.0, 128
        %1737 = vxpose.xlu0.b32.cont [14/16] 0.0, 128
        %1738 = vxpose.xlu0.b32.cont [15/16] 0.0, 128
        %1739 = vxpose.xlu0.b32.end [16/16] 0.0, 128
        %v1740 = vpop.trf.xlu0
        %v1741 = vpop.trf.xlu0
        %v1742 = vpop.trf.xlu0
        %v1743 = vpop.trf.xlu0
        %v1744 = vpop.trf.xlu0
        %v1745 = vpop.trf.xlu0
        %v1746 = vpop.trf.xlu0
        %v1747 = vpop.trf.xlu0
        %v1748 = vpop.trf.xlu0
        %v1749 = vpop.trf.xlu0
        %v1750 = vpop.trf.xlu0
        %v1751 = vpop.trf.xlu0
        %v1752 = vpop.trf.xlu0
        %v1753 = vpop.trf.xlu0
        %v1754 = vpop.trf.xlu0
        %v1755 = vpop.trf.xlu0
        %v1757 = vsel %vm1610, %v1708, 0
        %v1760 = vsel %vm1610, %v1709, 0
        %v1763 = vsel %vm1610, %v1710, 0
        %v1766 = vsel %vm1610, %v1711, 0
        %v1769 = vsel %vm1610, %v1712, 0
        %v1772 = vsel %vm1610, %v1713, 0
        %v1775 = vsel %vm1610, %v1714, 0
        %v1778 = vsel %vm1610, %v1715, 0
        %v1781 = vsel %vm1610, %v1716, 0
        %v1784 = vsel %vm1610, %v1717, 0
        %v1787 = vsel %vm1610, %v1718, 0
        %v1790 = vsel %vm1610, %v1719, 0
        %v1793 = vsel %vm1610, %v1720, 0
        %v1796 = vsel %vm1610, %v1721, 0
        %v1799 = vsel %vm1610, %v1722, 0
        %v1802 = vsel %vm1610, %v1723, 0
        %v1805 = vsel %vm1610, %v1740, 0
        %v1808 = vsel %vm1610, %v1741, 0
        %v1811 = vsel %vm1610, %v1742, 0
        %v1814 = vsel %vm1610, %v1743, 0
        %v1817 = vsel %vm1610, %v1744, 0
        %v1820 = vsel %vm1610, %v1745, 0
        %v1823 = vsel %vm1610, %v1746, 0
        %v1826 = vsel %vm1610, %v1747, 0
        %v1829 = vsel %vm1610, %v1748, 0
        %v1832 = vsel %vm1610, %v1749, 0
        %v1835 = vsel %vm1610, %v1750, 0
        %v1838 = vsel %vm1610, %v1751, 0
        %v1841 = vsel %vm1610, %v1752, 0
        %v1844 = vsel %vm1610, %v1753, 0
        %v1847 = vsel %vm1610, %v1754, 0
        %v1850 = vsel %vm1610, %v1755, 0
        %v1853 = vsel %vm1614, %v1688, 0
        %v1856 = vsel %vm1614, %v1690, 0
        %1858 = vmatprep.subr.mxu0 0.0
        %1859 = vmatpush1.msra.mxu0 0.0
        %1860 = vmatprep.subr.mxu0 0.0
        %1861 = vmatpush1.msra.mxu0 0.0
        %1862 = vmatprep.subr.mxu0 0.0
        %1863 = vmatpush1.msra.mxu0 0.0
        %1864 = vmatprep.subr.mxu0 0.0
        %1865 = vmatpush1.msra.mxu0 0.0
        %1866 = vmatprep.subr.mxu0 0.0
        %1867 = vmatpush1.msra.mxu0 0.0
        %1868 = vmatprep.subr.mxu0 0.0
        %1869 = vmatpush1.msra.mxu0 0.0
        %1870 = vmatprep.subr.mxu0 0.0
        %1871 = vmatpush1.msra.mxu0 0.0
        %1872 = vmatprep.subr.mxu0 0.0
        %1873 = vmatpush1.msra.mxu0 0.0
        %1874 = vmatprep.subr.mxu0 0.0
        %1875 = vmatpush1.msra.mxu0 0.0
        %1876 = vmatprep.subr.mxu0 0.0
        %1877 = vmatpush1.msra.mxu0 0.0
        %1878 = vmatprep.subr.mxu0 0.0
        %1879 = vmatpush1.msra.mxu0 0.0
        %1880 = vmatprep.subr.mxu0 0.0
        %1881 = vmatpush1.msra.mxu0 0.0
        %1882 = vmatprep.subr.mxu0 0.0
        %1883 = vmatpush1.msra.mxu0 0.0
        %1884 = vmatprep.subr.mxu0 0.0
        %1885 = vmatpush1.msra.mxu0 0.0
        %1886 = vmatprep.subr.mxu0 0.0
        %1887 = vmatpush1.msra.mxu0 0.0
        %1888 = vmatprep.subr.mxu0 %v1856
        %1889 = vmatpush1.msra.mxu0 %v1853
        %1890 = vmatprep.subr.mxu0 0.0
        %1891 = vmatpush2.msra.mxu0 0.0
        %1892 = vmatprep.subr.mxu0 0.0
        %1893 = vmatpush2.msra.mxu0 0.0
        %1894 = vmatprep.subr.mxu0 0.0
        %1895 = vmatpush2.msra.mxu0 0.0
        %1896 = vmatprep.subr.mxu0 0.0
        %1897 = vmatpush2.msra.mxu0 0.0
        %1898 = vmatprep.subr.mxu0 0.0
        %1899 = vmatpush2.msra.mxu0 0.0
        %1900 = vmatprep.subr.mxu0 0.0
        %1901 = vmatpush2.msra.mxu0 0.0
        %1902 = vmatprep.subr.mxu0 0.0
        %1903 = vmatpush2.msra.mxu0 0.0
        %1904 = vmatprep.subr.mxu0 0.0
        %1905 = vmatpush2.msra.mxu0 0.0
        %1906 = vmatprep.subr.mxu0 0.0
        %1907 = vmatpush2.msra.mxu0 0.0
        %1908 = vmatprep.subr.mxu0 0.0
        %1909 = vmatpush2.msra.mxu0 0.0
        %1910 = vmatprep.subr.mxu0 0.0
        %1911 = vmatpush2.msra.mxu0 0.0
        %1912 = vmatprep.subr.mxu0 0.0
        %1913 = vmatpush2.msra.mxu0 0.0
        %1914 = vmatprep.subr.mxu0 0.0
        %1915 = vmatpush2.msra.mxu0 0.0
        %1916 = vmatprep.subr.mxu0 0.0
        %1917 = vmatpush2.msra.mxu0 0.0
        %1918 = vmatprep.subr.mxu0 0.0
        %1919 = vmatpush2.msra.mxu0 0.0
        %1920 = vmatprep.subr.mxu0 0.0
        %1921 = vmatpush2.msra.mxu0 0.0
        %1922 = vmatprep.mubr.f32.mxu0 0.0
        %1923 = vmatmul.mubr.f32.gmra.mxu0 %v1757
        %v1924 = vpop.f32.mrf.mxu0
        %v1925 = vadd.f32 0.0, %v1924
        %v1926 = vpop.f32.mrf.mxu0
        %v1927 = vadd.f32 0.0, %v1926
        %1928 = vmatprep.mubr.f32.mxu0 0.0
        %1929 = vmatmul.mubr.f32.gmra.mxu0 %v1760
        %v1930 = vpop.f32.mrf.mxu0
        %v1931 = vadd.f32 0.0, %v1930
        %v1932 = vpop.f32.mrf.mxu0
        %v1933 = vadd.f32 0.0, %v1932
        %1934 = vmatprep.mubr.f32.mxu0 0.0
        %1935 = vmatmul.mubr.f32.gmra.mxu0 %v1763
        %v1936 = vpop.f32.mrf.mxu0
        %v1937 = vadd.f32 0.0, %v1936
        %v1938 = vpop.f32.mrf.mxu0
        %v1939 = vadd.f32 0.0, %v1938
        %1940 = vmatprep.mubr.f32.mxu0 0.0
        %1941 = vmatmul.mubr.f32.gmra.mxu0 %v1766
        %v1942 = vpop.f32.mrf.mxu0
        %v1943 = vadd.f32 0.0, %v1942
        %v1944 = vpop.f32.mrf.mxu0
        %v1945 = vadd.f32 0.0, %v1944
        %1946 = vmatprep.mubr.f32.mxu0 0.0
        %1947 = vmatmul.mubr.f32.gmra.mxu0 %v1769
        %v1948 = vpop.f32.mrf.mxu0
        %v1949 = vadd.f32 0.0, %v1948
        %v1950 = vpop.f32.mrf.mxu0
        %v1951 = vadd.f32 0.0, %v1950
        %1952 = vmatprep.mubr.f32.mxu0 0.0
        %1953 = vmatmul.mubr.f32.gmra.mxu0 %v1772
        %v1954 = vpop.f32.mrf.mxu0
        %v1955 = vadd.f32 0.0, %v1954
        %v1956 = vpop.f32.mrf.mxu0
        %v1957 = vadd.f32 0.0, %v1956
        %1958 = vmatprep.mubr.f32.mxu0 0.0
        %1959 = vmatmul.mubr.f32.gmra.mxu0 %v1775
        %v1960 = vpop.f32.mrf.mxu0
        %v1961 = vadd.f32 0.0, %v1960
        %v1962 = vpop.f32.mrf.mxu0
        %v1963 = vadd.f32 0.0, %v1962
        %1964 = vmatprep.mubr.f32.mxu0 0.0
        %1965 = vmatmul.mubr.f32.gmra.mxu0 %v1778
        %v1966 = vpop.f32.mrf.mxu0
        %v1967 = vadd.f32 0.0, %v1966
        %v1968 = vpop.f32.mrf.mxu0
        %v1969 = vadd.f32 0.0, %v1968
        %1970 = vmatprep.mubr.f32.mxu0 0.0
        %1971 = vmatmul.mubr.f32.gmra.mxu0 %v1781
        %v1972 = vpop.f32.mrf.mxu0
        %v1973 = vadd.f32 0.0, %v1972
        %v1974 = vpop.f32.mrf.mxu0
        %v1975 = vadd.f32 0.0, %v1974
        %1976 = vmatprep.mubr.f32.mxu0 0.0
        %1977 = vmatmul.mubr.f32.gmra.mxu0 %v1784
        %v1978 = vpop.f32.mrf.mxu0
        %v1979 = vadd.f32 0.0, %v1978
        %v1980 = vpop.f32.mrf.mxu0
        %v1981 = vadd.f32 0.0, %v1980
        %1982 = vmatprep.mubr.f32.mxu0 0.0
        %1983 = vmatmul.mubr.f32.gmra.mxu0 %v1787
        %v1984 = vpop.f32.mrf.mxu0
        %v1985 = vadd.f32 0.0, %v1984
        %v1986 = vpop.f32.mrf.mxu0
        %v1987 = vadd.f32 0.0, %v1986
        %1988 = vmatprep.mubr.f32.mxu0 0.0
        %1989 = vmatmul.mubr.f32.gmra.mxu0 %v1790
        %v1990 = vpop.f32.mrf.mxu0
        %v1991 = vadd.f32 0.0, %v1990
        %v1992 = vpop.f32.mrf.mxu0
        %v1993 = vadd.f32 0.0, %v1992
        %1994 = vmatprep.mubr.f32.mxu0 0.0
        %1995 = vmatmul.mubr.f32.gmra.mxu0 %v1793
        %v1996 = vpop.f32.mrf.mxu0
        %v1997 = vadd.f32 0.0, %v1996
        %v1998 = vpop.f32.mrf.mxu0
        %v1999 = vadd.f32 0.0, %v1998
        %2000 = vmatprep.mubr.f32.mxu0 0.0
        %2001 = vmatmul.mubr.f32.gmra.mxu0 %v1796
        %v2002 = vpop.f32.mrf.mxu0
        %v2003 = vadd.f32 0.0, %v2002
        %v2004 = vpop.f32.mrf.mxu0
        %v2005 = vadd.f32 0.0, %v2004
        %2006 = vmatprep.mubr.f32.mxu0 0.0
        %2007 = vmatmul.mubr.f32.gmra.mxu0 %v1799
        %v2008 = vpop.f32.mrf.mxu0
        %v2009 = vadd.f32 0.0, %v2008
        %v2010 = vpop.f32.mrf.mxu0
        %v2011 = vadd.f32 0.0, %v2010
        %2012 = vmatprep.mubr.f32.mxu0 0.0
        %2013 = vmatmul.mubr.f32.gmra.mxu0 %v1802
        %v2014 = vpop.f32.mrf.mxu0
        %v2015 = vadd.f32 0.0, %v2014
        %v2016 = vpop.f32.mrf.mxu0
        %v2017 = vadd.f32 0.0, %v2016
        %2018 = vmatprep.mubr.f32.mxu0 0.0
        %2019 = vmatmul.mubr.f32.gmra.mxu0 %v1805
        %v2020 = vpop.f32.mrf.mxu0
        %v2021 = vadd.f32 0.0, %v2020
        %v2022 = vpop.f32.mrf.mxu0
        %v2023 = vadd.f32 0.0, %v2022
        %2024 = vmatprep.mubr.f32.mxu0 0.0
        %2025 = vmatmul.mubr.f32.gmra.mxu0 %v1808
        %v2026 = vpop.f32.mrf.mxu0
        %v2027 = vadd.f32 0.0, %v2026
        %v2028 = vpop.f32.mrf.mxu0
        %v2029 = vadd.f32 0.0, %v2028
        %2030 = vmatprep.mubr.f32.mxu0 0.0
        %2031 = vmatmul.mubr.f32.gmra.mxu0 %v1811
        %v2032 = vpop.f32.mrf.mxu0
        %v2033 = vadd.f32 0.0, %v2032
        %v2034 = vpop.f32.mrf.mxu0
        %v2035 = vadd.f32 0.0, %v2034
        %2036 = vmatprep.mubr.f32.mxu0 0.0
        %2037 = vmatmul.mubr.f32.gmra.mxu0 %v1814
        %v2038 = vpop.f32.mrf.mxu0
        %v2039 = vadd.f32 0.0, %v2038
        %v2040 = vpop.f32.mrf.mxu0
        %v2041 = vadd.f32 0.0, %v2040
        %2042 = vmatprep.mubr.f32.mxu0 0.0
        %2043 = vmatmul.mubr.f32.gmra.mxu0 %v1817
        %v2044 = vpop.f32.mrf.mxu0
        %v2045 = vadd.f32 0.0, %v2044
        %v2046 = vpop.f32.mrf.mxu0
        %v2047 = vadd.f32 0.0, %v2046
        %2048 = vmatprep.mubr.f32.mxu0 0.0
        %2049 = vmatmul.mubr.f32.gmra.mxu0 %v1820
        %v2050 = vpop.f32.mrf.mxu0
        %v2051 = vadd.f32 0.0, %v2050
        %v2052 = vpop.f32.mrf.mxu0
        %v2053 = vadd.f32 0.0, %v2052
        %2054 = vmatprep.mubr.f32.mxu0 0.0
        %2055 = vmatmul.mubr.f32.gmra.mxu0 %v1823
        %v2056 = vpop.f32.mrf.mxu0
        %v2057 = vadd.f32 0.0, %v2056
        %v2058 = vpop.f32.mrf.mxu0
        %v2059 = vadd.f32 0.0, %v2058
        %2060 = vmatprep.mubr.f32.mxu0 0.0
        %2061 = vmatmul.mubr.f32.gmra.mxu0 %v1826
        %v2062 = vpop.f32.mrf.mxu0
        %v2063 = vadd.f32 0.0, %v2062
        %v2064 = vpop.f32.mrf.mxu0
        %v2065 = vadd.f32 0.0, %v2064
        %2066 = vmatprep.mubr.f32.mxu0 0.0
        %2067 = vmatmul.mubr.f32.gmra.mxu0 %v1829
        %v2068 = vpop.f32.mrf.mxu0
        %v2069 = vadd.f32 0.0, %v2068
        %v2070 = vpop.f32.mrf.mxu0
        %v2071 = vadd.f32 0.0, %v2070
        %2072 = vmatprep.mubr.f32.mxu0 0.0
        %2073 = vmatmul.mubr.f32.gmra.mxu0 %v1832
        %v2074 = vpop.f32.mrf.mxu0
        %v2075 = vadd.f32 0.0, %v2074
        %v2076 = vpop.f32.mrf.mxu0
        %v2077 = vadd.f32 0.0, %v2076
        %2078 = vmatprep.mubr.f32.mxu0 0.0
        %2079 = vmatmul.mubr.f32.gmra.mxu0 %v1835
        %v2080 = vpop.f32.mrf.mxu0
        %v2081 = vadd.f32 0.0, %v2080
        %v2082 = vpop.f32.mrf.mxu0
        %v2083 = vadd.f32 0.0, %v2082
        %2084 = vmatprep.mubr.f32.mxu0 0.0
        %2085 = vmatmul.mubr.f32.gmra.mxu0 %v1838
        %v2086 = vpop.f32.mrf.mxu0
        %v2087 = vadd.f32 0.0, %v2086
        %v2088 = vpop.f32.mrf.mxu0
        %v2089 = vadd.f32 0.0, %v2088
        %2090 = vmatprep.mubr.f32.mxu0 0.0
        %2091 = vmatmul.mubr.f32.gmra.mxu0 %v1841
        %v2092 = vpop.f32.mrf.mxu0
        %v2093 = vadd.f32 0.0, %v2092
        %v2094 = vpop.f32.mrf.mxu0
        %v2095 = vadd.f32 0.0, %v2094
        %2096 = vmatprep.mubr.f32.mxu0 0.0
        %2097 = vmatmul.mubr.f32.gmra.mxu0 %v1844
        %v2098 = vpop.f32.mrf.mxu0
        %v2099 = vadd.f32 0.0, %v2098
        %v2100 = vpop.f32.mrf.mxu0
        %v2101 = vadd.f32 0.0, %v2100
        %2102 = vmatprep.mubr.f32.mxu0 0.0
        %2103 = vmatmul.mubr.f32.gmra.mxu0 %v1847
        %v2104 = vpop.f32.mrf.mxu0
        %v2105 = vadd.f32 0.0, %v2104
        %v2106 = vpop.f32.mrf.mxu0
        %v2107 = vadd.f32 0.0, %v2106
        %2108 = vmatprep.mubr.f32.mxu0 0.0
        %2109 = vmatmul.mubr.f32.gmra.mxu0 %v1850
        %v2110 = vpop.f32.mrf.mxu0
        %v2111 = vadd.f32 0.0, %v2110
        %v2112 = vpop.f32.mrf.mxu0
        %v2113 = vadd.f32 0.0, %v2112
        %2114 = vdwg.mxu0
        %v2115 = vmax.f32 %v1925, %v1927
        %2116 = vmax.xlane.f32.xlu0 %v2115
        %v2117 = vpop.xlane.xlu0 %2116
        %v2118 = vmax.f32 %v1931, %v1933
        %2119 = vmax.xlane.f32.xlu0 %v2118
        %v2120 = vpop.xlane.xlu0 %2119
        %v2121 = vmax.f32 %v1937, %v1939
        %2122 = vmax.xlane.f32.xlu0 %v2121
        %v2123 = vpop.xlane.xlu0 %2122
        %v2124 = vmax.f32 %v1943, %v1945
        %2125 = vmax.xlane.f32.xlu0 %v2124
        %v2126 = vpop.xlane.xlu0 %2125
        %v2127 = vmax.f32 %v1949, %v1951
        %2128 = vmax.xlane.f32.xlu0 %v2127
        %v2129 = vpop.xlane.xlu0 %2128
        %v2130 = vmax.f32 %v1955, %v1957
        %2131 = vmax.xlane.f32.xlu0 %v2130
        %v2132 = vpop.xlane.xlu0 %2131
        %v2133 = vmax.f32 %v1961, %v1963
        %2134 = vmax.xlane.f32.xlu0 %v2133
        %v2135 = vpop.xlane.xlu0 %2134
        %v2136 = vmax.f32 %v1967, %v1969
        %2137 = vmax.xlane.f32.xlu0 %v2136
        %v2138 = vpop.xlane.xlu0 %2137
        %v2139 = vmax.f32 %v1973, %v1975
        %2140 = vmax.xlane.f32.xlu0 %v2139
        %v2141 = vpop.xlane.xlu0 %2140
        %v2142 = vmax.f32 %v1979, %v1981
        %2143 = vmax.xlane.f32.xlu0 %v2142
        %v2144 = vpop.xlane.xlu0 %2143
        %v2145 = vmax.f32 %v1985, %v1987
        %2146 = vmax.xlane.f32.xlu0 %v2145
        %v2147 = vpop.xlane.xlu0 %2146
        %v2148 = vmax.f32 %v1991, %v1993
        %2149 = vmax.xlane.f32.xlu0 %v2148
        %v2150 = vpop.xlane.xlu0 %2149
        %v2151 = vmax.f32 %v1997, %v1999
        %2152 = vmax.xlane.f32.xlu0 %v2151
        %v2153 = vpop.xlane.xlu0 %2152
        %v2154 = vmax.f32 %v2003, %v2005
        %2155 = vmax.xlane.f32.xlu0 %v2154
        %v2156 = vpop.xlane.xlu0 %2155
        %v2157 = vmax.f32 %v2009, %v2011
        %2158 = vmax.xlane.f32.xlu0 %v2157
        %v2159 = vpop.xlane.xlu0 %2158
        %v2160 = vmax.f32 %v2015, %v2017
        %2161 = vmax.xlane.f32.xlu0 %v2160
        %v2162 = vpop.xlane.xlu0 %2161
        %v2163 = vmax.f32 %v2021, %v2023
        %2164 = vmax.xlane.f32.xlu0 %v2163
        %v2165 = vpop.xlane.xlu0 %2164
        %v2166 = vmax.f32 %v2027, %v2029
        %2167 = vmax.xlane.f32.xlu0 %v2166
        %v2168 = vpop.xlane.xlu0 %2167
        %v2169 = vmax.f32 %v2033, %v2035
        %2170 = vmax.xlane.f32.xlu0 %v2169
        %v2171 = vpop.xlane.xlu0 %2170
        %v2172 = vmax.f32 %v2039, %v2041
        %2173 = vmax.xlane.f32.xlu0 %v2172
        %v2174 = vpop.xlane.xlu0 %2173
        %v2175 = vmax.f32 %v2045, %v2047
        %2176 = vmax.xlane.f32.xlu0 %v2175
        %v2177 = vpop.xlane.xlu0 %2176
        %v2178 = vmax.f32 %v2051, %v2053
        %2179 = vmax.xlane.f32.xlu0 %v2178
        %v2180 = vpop.xlane.xlu0 %2179
        %v2181 = vmax.f32 %v2057, %v2059
        %2182 = vmax.xlane.f32.xlu0 %v2181
        %v2183 = vpop.xlane.xlu0 %2182
        %v2184 = vmax.f32 %v2063, %v2065
        %2185 = vmax.xlane.f32.xlu0 %v2184
        %v2186 = vpop.xlane.xlu0 %2185
        %v2187 = vmax.f32 %v2069, %v2071
        %2188 = vmax.xlane.f32.xlu0 %v2187
        %v2189 = vpop.xlane.xlu0 %2188
        %v2190 = vmax.f32 %v2075, %v2077
        %2191 = vmax.xlane.f32.xlu0 %v2190
        %v2192 = vpop.xlane.xlu0 %2191
        %v2193 = vmax.f32 %v2081, %v2083
        %2194 = vmax.xlane.f32.xlu0 %v2193
        %v2195 = vpop.xlane.xlu0 %2194
        %v2196 = vmax.f32 %v2087, %v2089
        %2197 = vmax.xlane.f32.xlu0 %v2196
        %v2198 = vpop.xlane.xlu0 %2197
        %v2199 = vmax.f32 %v2093, %v2095
        %2200 = vmax.xlane.f32.xlu0 %v2199
        %v2201 = vpop.xlane.xlu0 %2200
        %v2202 = vmax.f32 %v2099, %v2101
        %2203 = vmax.xlane.f32.xlu0 %v2202
        %v2204 = vpop.xlane.xlu0 %2203
        %v2205 = vmax.f32 %v2105, %v2107
        %2206 = vmax.xlane.f32.xlu0 %v2205
        %v2207 = vpop.xlane.xlu0 %2206
        %v2208 = vmax.f32 %v2111, %v2113
        %2209 = vmax.xlane.f32.xlu0 %v2208
        %v2210 = vpop.xlane.xlu0 %2209
        %v2211 = vsub.f32 %v1925, %v2117
        %v2212 = vsub.f32 %v1927, %v2117
        %v2213 = vsub.f32 %v1931, %v2120
        %v2214 = vsub.f32 %v1933, %v2120
        %v2215 = vsub.f32 %v1937, %v2123
        %v2216 = vsub.f32 %v1939, %v2123
        %v2217 = vsub.f32 %v1943, %v2126
        %v2218 = vsub.f32 %v1945, %v2126
        %v2219 = vsub.f32 %v1949, %v2129
        %v2220 = vsub.f32 %v1951, %v2129
        %v2221 = vsub.f32 %v1955, %v2132
        %v2222 = vsub.f32 %v1957, %v2132
        %v2223 = vsub.f32 %v1961, %v2135
        %v2224 = vsub.f32 %v1963, %v2135
        %v2225 = vsub.f32 %v1967, %v2138
        %v2226 = vsub.f32 %v1969, %v2138
        %v2227 = vsub.f32 %v1973, %v2141
        %v2228 = vsub.f32 %v1975, %v2141
        %v2229 = vsub.f32 %v1979, %v2144
        %v2230 = vsub.f32 %v1981, %v2144
        %v2231 = vsub.f32 %v1985, %v2147
        %v2232 = vsub.f32 %v1987, %v2147
        %v2233 = vsub.f32 %v1991, %v2150
        %v2234 = vsub.f32 %v1993, %v2150
        %v2235 = vsub.f32 %v1997, %v2153
        %v2236 = vsub.f32 %v1999, %v2153
        %v2237 = vsub.f32 %v2003, %v2156
        %v2238 = vsub.f32 %v2005, %v2156
        %v2239 = vsub.f32 %v2009, %v2159
        %v2240 = vsub.f32 %v2011, %v2159
        %v2241 = vsub.f32 %v2015, %v2162
        %v2242 = vsub.f32 %v2017, %v2162
        %v2243 = vsub.f32 %v2021, %v2165
        %v2244 = vsub.f32 %v2023, %v2165
        %v2245 = vsub.f32 %v2027, %v2168
        %v2246 = vsub.f32 %v2029, %v2168
        %v2247 = vsub.f32 %v2033, %v2171
        %v2248 = vsub.f32 %v2035, %v2171
        %v2249 = vsub.f32 %v2039, %v2174
        %v2250 = vsub.f32 %v2041, %v2174
        %v2251 = vsub.f32 %v2045, %v2177
        %v2252 = vsub.f32 %v2047, %v2177
        %v2253 = vsub.f32 %v2051, %v2180
        %v2254 = vsub.f32 %v2053, %v2180
        %v2255 = vsub.f32 %v2057, %v2183
        %v2256 = vsub.f32 %v2059, %v2183
        %v2257 = vsub.f32 %v2063, %v2186
        %v2258 = vsub.f32 %v2065, %v2186
        %v2259 = vsub.f32 %v2069, %v2189
        %v2260 = vsub.f32 %v2071, %v2189
        %v2261 = vsub.f32 %v2075, %v2192
        %v2262 = vsub.f32 %v2077, %v2192
        %v2263 = vsub.f32 %v2081, %v2195
        %v2264 = vsub.f32 %v2083, %v2195
        %v2265 = vsub.f32 %v2087, %v2198
        %v2266 = vsub.f32 %v2089, %v2198
        %v2267 = vsub.f32 %v2093, %v2201
        %v2268 = vsub.f32 %v2095, %v2201
        %v2269 = vsub.f32 %v2099, %v2204
        %v2270 = vsub.f32 %v2101, %v2204
        %v2271 = vsub.f32 %v2105, %v2207
        %v2272 = vsub.f32 %v2107, %v2207
        %v2273 = vsub.f32 %v2111, %v2210
        %v2274 = vsub.f32 %v2113, %v2210
        %v2275 = vmul.f32 %v2211, 1.442695
        %v2276 = vpow.pop %v2275
        %v2277 = vmul.f32 %v2212, 1.442695
        %v2278 = vpow.pop %v2277
        %v2279 = vmul.f32 %v2213, 1.442695
        %v2280 = vpow.pop %v2279
        %v2281 = vmul.f32 %v2214, 1.442695
        %v2282 = vpow.pop %v2281
        %v2283 = vmul.f32 %v2215, 1.442695
        %v2284 = vpow.pop %v2283
        %v2285 = vmul.f32 %v2216, 1.442695
        %v2286 = vpow.pop %v2285
        %v2287 = vmul.f32 %v2217, 1.442695
        %v2288 = vpow.pop %v2287
        %v2289 = vmul.f32 %v2218, 1.442695
        %v2290 = vpow.pop %v2289
        %v2291 = vmul.f32 %v2219, 1.442695
        %v2292 = vpow.pop %v2291
        %v2293 = vmul.f32 %v2220, 1.442695
        %v2294 = vpow.pop %v2293
        %v2295 = vmul.f32 %v2221, 1.442695
        %v2296 = vpow.pop %v2295
        %v2297 = vmul.f32 %v2222, 1.442695
        %v2298 = vpow.pop %v2297
        %v2299 = vmul.f32 %v2223, 1.442695
        %v2300 = vpow.pop %v2299
        %v2301 = vmul.f32 %v2224, 1.442695
        %v2302 = vpow.pop %v2301
        %v2303 = vmul.f32 %v2225, 1.442695
        %v2304 = vpow.pop %v2303
        %v2305 = vmul.f32 %v2226, 1.442695
        %v2306 = vpow.pop %v2305
        %v2307 = vmul.f32 %v2227, 1.442695
        %v2308 = vpow.pop %v2307
        %v2309 = vmul.f32 %v2228, 1.442695
        %v2310 = vpow.pop %v2309
        %v2311 = vmul.f32 %v2229, 1.442695
        %v2312 = vpow.pop %v2311
        %v2313 = vmul.f32 %v2230, 1.442695
        %v2314 = vpow.pop %v2313
        %v2315 = vmul.f32 %v2231, 1.442695
        %v2316 = vpow.pop %v2315
        %v2317 = vmul.f32 %v2232, 1.442695
        %v2318 = vpow.pop %v2317
        %v2319 = vmul.f32 %v2233, 1.442695
        %v2320 = vpow.pop %v2319
        %v2321 = vmul.f32 %v2234, 1.442695
        %v2322 = vpow.pop %v2321
        %v2323 = vmul.f32 %v2235, 1.442695
        %v2324 = vpow.pop %v2323
        %v2325 = vmul.f32 %v2236, 1.442695
        %v2326 = vpow.pop %v2325
        %v2327 = vmul.f32 %v2237, 1.442695
        %v2328 = vpow.pop %v2327
        %v2329 = vmul.f32 %v2238, 1.442695
        %v2330 = vpow.pop %v2329
        %v2331 = vmul.f32 %v2239, 1.442695
        %v2332 = vpow.pop %v2331
        %v2333 = vmul.f32 %v2240, 1.442695
        %v2334 = vpow.pop %v2333
        %v2335 = vmul.f32 %v2241, 1.442695
        %v2336 = vpow.pop %v2335
        %v2337 = vmul.f32 %v2242, 1.442695
        %v2338 = vpow.pop %v2337
        %v2339 = vmul.f32 %v2243, 1.442695
        %v2340 = vpow.pop %v2339
        %v2341 = vmul.f32 %v2244, 1.442695
        %v2342 = vpow.pop %v2341
        %v2343 = vmul.f32 %v2245, 1.442695
        %v2344 = vpow.pop %v2343
        %v2345 = vmul.f32 %v2246, 1.442695
        %v2346 = vpow.pop %v2345
        %v2347 = vmul.f32 %v2247, 1.442695
        %v2348 = vpow.pop %v2347
        %v2349 = vmul.f32 %v2248, 1.442695
        %v2350 = vpow.pop %v2349
        %v2351 = vmul.f32 %v2249, 1.442695
        %v2352 = vpow.pop %v2351
        %v2353 = vmul.f32 %v2250, 1.442695
        %v2354 = vpow.pop %v2353
        %v2355 = vmul.f32 %v2251, 1.442695
        %v2356 = vpow.pop %v2355
        %v2357 = vmul.f32 %v2252, 1.442695
        %v2358 = vpow.pop %v2357
        %v2359 = vmul.f32 %v2253, 1.442695
        %v2360 = vpow.pop %v2359
        %v2361 = vmul.f32 %v2254, 1.442695
        %v2362 = vpow.pop %v2361
        %v2363 = vmul.f32 %v2255, 1.442695
        %v2364 = vpow.pop %v2363
        %v2365 = vmul.f32 %v2256, 1.442695
        %v2366 = vpow.pop %v2365
        %v2367 = vmul.f32 %v2257, 1.442695
        %v2368 = vpow.pop %v2367
        %v2369 = vmul.f32 %v2258, 1.442695
        %v2370 = vpow.pop %v2369
        %v2371 = vmul.f32 %v2259, 1.442695
        %v2372 = vpow.pop %v2371
        %v2373 = vmul.f32 %v2260, 1.442695
        %v2374 = vpow.pop %v2373
        %v2375 = vmul.f32 %v2261, 1.442695
        %v2376 = vpow.pop %v2375
        %v2377 = vmul.f32 %v2262, 1.442695
        %v2378 = vpow.pop %v2377
        %v2379 = vmul.f32 %v2263, 1.442695
        %v2380 = vpow.pop %v2379
        %v2381 = vmul.f32 %v2264, 1.442695
        %v2382 = vpow.pop %v2381
        %v2383 = vmul.f32 %v2265, 1.442695
        %v2384 = vpow.pop %v2383
        %v2385 = vmul.f32 %v2266, 1.442695
        %v2386 = vpow.pop %v2385
        %v2387 = vmul.f32 %v2267, 1.442695
        %v2388 = vpow.pop %v2387
        %v2389 = vmul.f32 %v2268, 1.442695
        %v2390 = vpow.pop %v2389
        %v2391 = vmul.f32 %v2269, 1.442695
        %v2392 = vpow.pop %v2391
        %v2393 = vmul.f32 %v2270, 1.442695
        %v2394 = vpow.pop %v2393
        %v2395 = vmul.f32 %v2271, 1.442695
        %v2396 = vpow.pop %v2395
        %v2397 = vmul.f32 %v2272, 1.442695
        %v2398 = vpow.pop %v2397
        %v2399 = vmul.f32 %v2273, 1.442695
        %v2400 = vpow.pop %v2399
        %v2401 = vmul.f32 %v2274, 1.442695
        %v2402 = vpow.pop %v2401
        %v2403 = vadd.f32 %v2276, %v2278
        %2404 = vadd.xlane.f32.xlu0 %v2403
        %v2405 = vpop.xlane.xlu0 %2404
        %v2406 = vadd.f32 %v2280, %v2282
        %2407 = vadd.xlane.f32.xlu0 %v2406
        %v2408 = vpop.xlane.xlu0 %2407
        %v2409 = vadd.f32 %v2284, %v2286
        %2410 = vadd.xlane.f32.xlu0 %v2409
        %v2411 = vpop.xlane.xlu0 %2410
        %v2412 = vadd.f32 %v2288, %v2290
        %2413 = vadd.xlane.f32.xlu0 %v2412
        %v2414 = vpop.xlane.xlu0 %2413
        %v2415 = vadd.f32 %v2292, %v2294
        %2416 = vadd.xlane.f32.xlu0 %v2415
        %v2417 = vpop.xlane.xlu0 %2416
        %v2418 = vadd.f32 %v2296, %v2298
        %2419 = vadd.xlane.f32.xlu0 %v2418
        %v2420 = vpop.xlane.xlu0 %2419
        %v2421 = vadd.f32 %v2300, %v2302
        %2422 = vadd.xlane.f32.xlu0 %v2421
        %v2423 = vpop.xlane.xlu0 %2422
        %v2424 = vadd.f32 %v2304, %v2306
        %2425 = vadd.xlane.f32.xlu0 %v2424
        %v2426 = vpop.xlane.xlu0 %2425
        %v2427 = vadd.f32 %v2308, %v2310
        %2428 = vadd.xlane.f32.xlu0 %v2427
        %v2429 = vpop.xlane.xlu0 %2428
        %v2430 = vadd.f32 %v2312, %v2314
        %2431 = vadd.xlane.f32.xlu0 %v2430
        %v2432 = vpop.xlane.xlu0 %2431
        %v2433 = vadd.f32 %v2316, %v2318
        %2434 = vadd.xlane.f32.xlu0 %v2433
        %v2435 = vpop.xlane.xlu0 %2434
        %v2436 = vadd.f32 %v2320, %v2322
        %2437 = vadd.xlane.f32.xlu0 %v2436
        %v2438 = vpop.xlane.xlu0 %2437
        %v2439 = vadd.f32 %v2324, %v2326
        %2440 = vadd.xlane.f32.xlu0 %v2439
        %v2441 = vpop.xlane.xlu0 %2440
        %v2442 = vadd.f32 %v2328, %v2330
        %2443 = vadd.xlane.f32.xlu0 %v2442
        %v2444 = vpop.xlane.xlu0 %2443
        %v2445 = vadd.f32 %v2332, %v2334
        %2446 = vadd.xlane.f32.xlu0 %v2445
        %v2447 = vpop.xlane.xlu0 %2446
        %v2448 = vadd.f32 %v2336, %v2338
        %2449 = vadd.xlane.f32.xlu0 %v2448
        %v2450 = vpop.xlane.xlu0 %2449
        %v2451 = vadd.f32 %v2340, %v2342
        %2452 = vadd.xlane.f32.xlu0 %v2451
        %v2453 = vpop.xlane.xlu0 %2452
        %v2454 = vadd.f32 %v2344, %v2346
        %2455 = vadd.xlane.f32.xlu0 %v2454
        %v2456 = vpop.xlane.xlu0 %2455
        %v2457 = vadd.f32 %v2348, %v2350
        %2458 = vadd.xlane.f32.xlu0 %v2457
        %v2459 = vpop.xlane.xlu0 %2458
        %v2460 = vadd.f32 %v2352, %v2354
        %2461 = vadd.xlane.f32.xlu0 %v2460
        %v2462 = vpop.xlane.xlu0 %2461
        %v2463 = vadd.f32 %v2356, %v2358
        %2464 = vadd.xlane.f32.xlu0 %v2463
        %v2465 = vpop.xlane.xlu0 %2464
        %v2466 = vadd.f32 %v2360, %v2362
        %2467 = vadd.xlane.f32.xlu0 %v2466
        %v2468 = vpop.xlane.xlu0 %2467
        %v2469 = vadd.f32 %v2364, %v2366
        %2470 = vadd.xlane.f32.xlu0 %v2469
        %v2471 = vpop.xlane.xlu0 %2470
        %v2472 = vadd.f32 %v2368, %v2370
        %2473 = vadd.xlane.f32.xlu0 %v2472
        %v2474 = vpop.xlane.xlu0 %2473
        %v2475 = vadd.f32 %v2372, %v2374
        %2476 = vadd.xlane.f32.xlu0 %v2475
        %v2477 = vpop.xlane.xlu0 %2476
        %v2478 = vadd.f32 %v2376, %v2378
        %2479 = vadd.xlane.f32.xlu0 %v2478
        %v2480 = vpop.xlane.xlu0 %2479
        %v2481 = vadd.f32 %v2380, %v2382
        %2482 = vadd.xlane.f32.xlu0 %v2481
        %v2483 = vpop.xlane.xlu0 %2482
        %v2484 = vadd.f32 %v2384, %v2386
        %2485 = vadd.xlane.f32.xlu0 %v2484
        %v2486 = vpop.xlane.xlu0 %2485
        %v2487 = vadd.f32 %v2388, %v2390
        %2488 = vadd.xlane.f32.xlu0 %v2487
        %v2489 = vpop.xlane.xlu0 %2488
        %v2490 = vadd.f32 %v2392, %v2394
        %2491 = vadd.xlane.f32.xlu0 %v2490
        %v2492 = vpop.xlane.xlu0 %2491
        %v2493 = vadd.f32 %v2396, %v2398
        %2494 = vadd.xlane.f32.xlu0 %v2493
        %v2495 = vpop.xlane.xlu0 %2494
        %v2496 = vadd.f32 %v2400, %v2402
        %2497 = vadd.xlane.f32.xlu0 %v2496
        %v2498 = vpop.xlane.xlu0 %2497
        %v2499 = vrcp.pop %v2405
        %v2500 = vrcp.pop %v2408
        %v2501 = vrcp.pop %v2411
        %v2502 = vrcp.pop %v2414
        %v2503 = vrcp.pop %v2417
        %v2504 = vrcp.pop %v2420
        %v2505 = vrcp.pop %v2423
        %v2506 = vrcp.pop %v2426
        %v2507 = vrcp.pop %v2429
        %v2508 = vrcp.pop %v2432
        %v2509 = vrcp.pop %v2435
        %v2510 = vrcp.pop %v2438
        %v2511 = vrcp.pop %v2441
        %v2512 = vrcp.pop %v2444
        %v2513 = vrcp.pop %v2447
        %v2514 = vrcp.pop %v2450
        %v2515 = vrcp.pop %v2453
        %v2516 = vrcp.pop %v2456
        %v2517 = vrcp.pop %v2459
        %v2518 = vrcp.pop %v2462
        %v2519 = vrcp.pop %v2465
        %v2520 = vrcp.pop %v2468
        %v2521 = vrcp.pop %v2471
        %v2522 = vrcp.pop %v2474
        %v2523 = vrcp.pop %v2477
        %v2524 = vrcp.pop %v2480
        %v2525 = vrcp.pop %v2483
        %v2526 = vrcp.pop %v2486
        %v2527 = vrcp.pop %v2489
        %v2528 = vrcp.pop %v2492
        %v2529 = vrcp.pop %v2495
        %v2530 = vrcp.pop %v2498
        %v2531 = vmul.f32 %v2276, %v2499
        %v2532 = vmul.f32 %v2278, %v2499
        %v2533 = vmul.f32 %v2280, %v2500
        %v2534 = vmul.f32 %v2282, %v2500
        %v2535 = vmul.f32 %v2284, %v2501
        %v2536 = vmul.f32 %v2286, %v2501
        %v2537 = vmul.f32 %v2288, %v2502
        %v2538 = vmul.f32 %v2290, %v2502
        %v2539 = vmul.f32 %v2292, %v2503
        %v2540 = vmul.f32 %v2294, %v2503
        %v2541 = vmul.f32 %v2296, %v2504
        %v2542 = vmul.f32 %v2298, %v2504
        %v2543 = vmul.f32 %v2300, %v2505
        %v2544 = vmul.f32 %v2302, %v2505
        %v2545 = vmul.f32 %v2304, %v2506
        %v2546 = vmul.f32 %v2306, %v2506
        %v2547 = vmul.f32 %v2308, %v2507
        %v2548 = vmul.f32 %v2310, %v2507
        %v2549 = vmul.f32 %v2312, %v2508
        %v2550 = vmul.f32 %v2314, %v2508
        %v2551 = vmul.f32 %v2316, %v2509
        %v2552 = vmul.f32 %v2318, %v2509
        %v2553 = vmul.f32 %v2320, %v2510
        %v2554 = vmul.f32 %v2322, %v2510
        %v2555 = vmul.f32 %v2324, %v2511
        %v2556 = vmul.f32 %v2326, %v2511
        %v2557 = vmul.f32 %v2328, %v2512
        %v2558 = vmul.f32 %v2330, %v2512
        %v2559 = vmul.f32 %v2332, %v2513
        %v2560 = vmul.f32 %v2334, %v2513
        %v2561 = vmul.f32 %v2336, %v2514
        %v2562 = vmul.f32 %v2338, %v2514
        %v2563 = vmul.f32 %v2340, %v2515
        %v2564 = vmul.f32 %v2342, %v2515
        %v2565 = vmul.f32 %v2344, %v2516
        %v2566 = vmul.f32 %v2346, %v2516
        %v2567 = vmul.f32 %v2348, %v2517
        %v2568 = vmul.f32 %v2350, %v2517
        %v2569 = vmul.f32 %v2352, %v2518
        %v2570 = vmul.f32 %v2354, %v2518
        %v2571 = vmul.f32 %v2356, %v2519
        %v2572 = vmul.f32 %v2358, %v2519
        %v2573 = vmul.f32 %v2360, %v2520
        %v2574 = vmul.f32 %v2362, %v2520
        %v2575 = vmul.f32 %v2364, %v2521
        %v2576 = vmul.f32 %v2366, %v2521
        %v2577 = vmul.f32 %v2368, %v2522
        %v2578 = vmul.f32 %v2370, %v2522
        %v2579 = vmul.f32 %v2372, %v2523
        %v2580 = vmul.f32 %v2374, %v2523
        %v2581 = vmul.f32 %v2376, %v2524
        %v2582 = vmul.f32 %v2378, %v2524
        %v2583 = vmul.f32 %v2380, %v2525
        %v2584 = vmul.f32 %v2382, %v2525
        %v2585 = vmul.f32 %v2384, %v2526
        %v2586 = vmul.f32 %v2386, %v2526
        %v2587 = vmul.f32 %v2388, %v2527
        %v2588 = vmul.f32 %v2390, %v2527
        %v2589 = vmul.f32 %v2392, %v2528
        %v2590 = vmul.f32 %v2394, %v2528
        %v2591 = vmul.f32 %v2396, %v2529
        %v2592 = vmul.f32 %v2398, %v2529
        %v2593 = vmul.f32 %v2400, %v2530
        %v2594 = vmul.f32 %v2402, %v2530
        %v2595 = vpack.c.bf16 %v2533, %v2531
        %v2596 = vpack.c.bf16 %v2534, %v2532
        %v2597 = vpack.c.bf16 %v2537, %v2535
        %v2598 = vpack.c.bf16 %v2538, %v2536
        %v2599 = vpack.c.bf16 %v2541, %v2539
        %v2600 = vpack.c.bf16 %v2542, %v2540
        %v2601 = vpack.c.bf16 %v2545, %v2543
        %v2602 = vpack.c.bf16 %v2546, %v2544
        %v2603 = vpack.c.bf16 %v2549, %v2547
        %v2604 = vpack.c.bf16 %v2550, %v2548
        %v2605 = vpack.c.bf16 %v2553, %v2551
        %v2606 = vpack.c.bf16 %v2554, %v2552
        %v2607 = vpack.c.bf16 %v2557, %v2555
        %v2608 = vpack.c.bf16 %v2558, %v2556
        %v2609 = vpack.c.bf16 %v2561, %v2559
        %v2610 = vpack.c.bf16 %v2562, %v2560
        %v2611 = vpack.c.bf16 %v2565, %v2563
        %v2612 = vpack.c.bf16 %v2566, %v2564
        %v2613 = vpack.c.bf16 %v2569, %v2567
        %v2614 = vpack.c.bf16 %v2570, %v2568
        %v2615 = vpack.c.bf16 %v2573, %v2571
        %v2616 = vpack.c.bf16 %v2574, %v2572
        %v2617 = vpack.c.bf16 %v2577, %v2575
        %v2618 = vpack.c.bf16 %v2578, %v2576
        %v2619 = vpack.c.bf16 %v2581, %v2579
        %v2620 = vpack.c.bf16 %v2582, %v2580
        %v2621 = vpack.c.bf16 %v2585, %v2583
        %v2622 = vpack.c.bf16 %v2586, %v2584
        %v2623 = vpack.c.bf16 %v2589, %v2587
        %v2624 = vpack.c.bf16 %v2590, %v2588
        %v2625 = vpack.c.bf16 %v2593, %v2591
        %v2626 = vpack.c.bf16 %v2594, %v2592
        %v2627 = vpack.c.bf16 %v1524, %v1518
        %v2628 = vpack.c.bf16 %v1526, %v1520
        %v2629 = vpack.c.bf16 %v1536, %v1530
        %v2630 = vpack.c.bf16 %v1538, %v1532
        %2631 = vmatprep.subr.bf16.mxu0 %v2610
        %2632 = vmatpush1.bf16.msra.mxu0 %v2609
        %2633 = vmatprep.subr.bf16.mxu0 %v2608
        %2634 = vmatpush1.bf16.msra.mxu0 %v2607
        %2635 = vmatprep.subr.bf16.mxu0 %v2606
        %2636 = vmatpush1.bf16.msra.mxu0 %v2605
        %2637 = vmatprep.subr.bf16.mxu0 %v2604
        %2638 = vmatpush1.bf16.msra.mxu0 %v2603
        %2639 = vmatprep.subr.bf16.mxu0 %v2602
        %2640 = vmatpush1.bf16.msra.mxu0 %v2601
        %2641 = vmatprep.subr.bf16.mxu0 %v2600
        %2642 = vmatpush1.bf16.msra.mxu0 %v2599
        %2643 = vmatprep.subr.bf16.mxu0 %v2598
        %2644 = vmatpush1.bf16.msra.mxu0 %v2597
        %2645 = vmatprep.subr.bf16.mxu0 %v2596
        %2646 = vmatpush1.bf16.msra.mxu0 %v2595
        %2647 = vmatprep.subr.bf16.mxu0 %v2626
        %2648 = vmatpush2.bf16.msra.mxu0 %v2625
        %2649 = vmatprep.subr.bf16.mxu0 %v2624
        %2650 = vmatpush2.bf16.msra.mxu0 %v2623
        %2651 = vmatprep.subr.bf16.mxu0 %v2622
        %2652 = vmatpush2.bf16.msra.mxu0 %v2621
        %2653 = vmatprep.subr.bf16.mxu0 %v2620
        %2654 = vmatpush2.bf16.msra.mxu0 %v2619
        %2655 = vmatprep.subr.bf16.mxu0 %v2618
        %2656 = vmatpush2.bf16.msra.mxu0 %v2617
        %2657 = vmatprep.subr.bf16.mxu0 %v2616
        %2658 = vmatpush2.bf16.msra.mxu0 %v2615
        %2659 = vmatprep.subr.bf16.mxu0 %v2614
        %2660 = vmatpush2.bf16.msra.mxu0 %v2613
        %2661 = vmatprep.subr.bf16.mxu0 %v2612
        %2662 = vmatpush2.bf16.msra.mxu0 %v2611
        %2663 = vmatprep.mubr.bf16.mxu0 %v2628
        %2664 = vmatmul.mubr.bf16.gmra.mxu0 %v2627
        %v2665 = vpop.f32.mrf.mxu0
        %v2666 = vadd.f32 0.0, %v2665
        %v2667 = vpop.f32.mrf.mxu0
        %v2668 = vadd.f32 0.0, %v2667
        %v2669 = vpop.f32.mrf.mxu0
        %v2670 = vadd.f32 0.0, %v2669
        %v2671 = vpop.f32.mrf.mxu0
        %v2672 = vadd.f32 0.0, %v2671
        %2673 = vmatprep.mubr.bf16.mxu0 %v2630
        %2674 = vmatmul.mubr.bf16.gmra.mxu0 %v2629
        %v2675 = vpop.f32.mrf.mxu0
        %v2676 = vadd.f32 0.0, %v2675
        %v2677 = vpop.f32.mrf.mxu0
        %v2678 = vadd.f32 0.0, %v2677
        %v2679 = vpop.f32.mrf.mxu0
        %v2680 = vadd.f32 0.0, %v2679
        %v2681 = vpop.f32.mrf.mxu0
        %v2682 = vadd.f32 0.0, %v2681
        %2683 = vdwg.mxu0
        %s2684 = sld [smem:[#allocation2]]
        %v2685 = vstv %s2684
        %v2686 = vmul.f32 %v2685, %v2666
        %v2687 = vmul.f32 %v2685, %v2668
        %v2688 = vmul.f32 %v2685, %v2670
        %v2689 = vmul.f32 %v2685, %v2672
        %v2690 = vmul.f32 %v2685, %v2676
        %v2691 = vmul.f32 %v2685, %v2678
        %v2692 = vmul.f32 %v2685, %v2680
        %v2693 = vmul.f32 %v2685, %v2682
        %v2694 = vadd.f32 %v2686, %v450
        %v2695 = vadd.f32 %v2687, %v451
        %v2696 = vadd.f32 %v2688, %v452
        %v2697 = vadd.f32 %v2689, %v453
        %v2698 = vadd.f32 %v2690, %v454
        %v2699 = vadd.f32 %v2691, %v455
        %v2700 = vadd.f32 %v2692, %v456
        %v2701 = vadd.f32 %v2693, %v457
        %2702 = vst [vmem:[%s449] sm:$0xff] %v2694
        %2703 = vst [vmem:[%s449 + $0x8] sm:$0xff] %v2695
        %2704 = vst [vmem:[%s449 + $0x10] sm:$0xff] %v2696
        %2705 = vst [vmem:[%s449 + $0x18] sm:$0xff] %v2697
        %2706 = vst [vmem:[%s449 + $0x20] sm:$0xff] %v2698
        %2707 = vst [vmem:[%s449 + $0x28] sm:$0xff] %v2699
        %2708 = vst [vmem:[%s449 + $0x30] sm:$0xff] %v2700
        %2709 = vst [vmem:[%s449 + $0x38] sm:$0xff] %v2701
        %s2710 = sand.u32 %s275, 1
        %s2711 = scalar_lea.sflag [#allocation5], %s2710
        %s2712 = sand.u32 %s275, 1
        %s2713 = smul.addr %s2712, 64
        %s2714 = scalar_lea.vmem [#allocation11], %s2713
        // Predicated region
        $region81: #{tpu_custom_call.1} parent=63 // pred_check
          %p2715 = pneg %p285
        $region82: #{tpu_custom_call.1} parent=63 // pred_check_branch
          %2717 = sbr.rel (%p2715) target = $region84
        $region83: #{tpu_custom_call.1} parent=63 // pred_region
          %s2719 = ssub.s32 1024, 1024
          %2720 = vsyncadd %s2711, %s2719
          %s2721 = smul.addr %s31, 8
          %s2722 = smul.addr %s2721, 128
          %s2723 = scalar_lea.hbm %s11, %s2722
          %s2724 = sshll.u32 %s2714, 4
          %s2725 = int_to_ptr.vmem [resolvable:$true] %s2724
          %2730 = dma.vmem_to_hbm [thread:$0]  %s2725, 1024, %s2723, %s2711, 256, 256, 16
        $region84: #{tpu_custom_call.1} parent=63 // pred_fallthru
          _
      $region64: #{tpu_custom_call.1} parent=5 // pred_fallthru
        _
      %p2731 = scmp.le.s32.totalorder 2, %s26
      // Predicated region
      $region85: #{tpu_custom_call.1} parent=5 // pred_check
        %p2732 = pneg %p2731
      $region86: #{tpu_custom_call.1} parent=5 // pred_check_branch
        %2734 = sbr.rel (%p2732) target = $region88
      $region87: #{tpu_custom_call.1} parent=5 // pred_region
        %s2735 = ssub.s32 %s26, 2
        // Predicated region
        $region89: #{tpu_custom_call.1} parent=87 // pred_check
          %p2736 = pneg %p291
        $region90: #{tpu_custom_call.1} parent=87 // pred_check_branch
          %2738 = sbr.rel (%p2736) target = $region92
        $region91: #{tpu_custom_call.1} parent=87 // pred_region
          %s2739 = sand.u32 %s276, 1
          %s2740 = scalar_lea.sflag [#allocation5], %s2739
          %s2741 = sand.u32 %s276, 1
          %s2742 = smul.addr %s2741, 64
          %s2743 = scalar_lea.vmem [#allocation11], %s2742
          %2744 = dma.done %s2740, 1024
        $region92: #{tpu_custom_call.1} parent=87 // pred_fallthru
          _
      $region88: #{tpu_custom_call.1} parent=5 // pred_fallthru
        _
    $region6: #{tpu_custom_call.1} parent=1 // loop_footer
      %s30 = sadd.s32 1, %s26
    $region7: #{tpu_custom_call.1} parent=1 // loop_footer_branch
      %25 = sbr.rel target = $region3
    $region8: #{tpu_custom_call.1} parent=1 // loop_exit
      _
    %2745 = vsyncpa [#allocation4], 1
    %s2746 = scalar_lea.sflag [#allocation4], 1
    %2747 = vsyncpa %s2746, 1
    %2748 = vsyncpa [#allocation7], 1
    %2749 = vsyncpa [#allocation10], 1
    %2750 = vsyncpa [#allocation5], 1
    %s2751 = scalar_lea.sflag [#allocation5], 1
    %2752 = vsyncpa %s2751, 1

</llo_original>
